<compile_context>
chip_gen: v5e
topology: v5e:2x2
jax: 0.10.0
libtpu: 0.0.40
codegen_flags: <defaults>
</compile_context>

<pallas_src>
import functools
import numpy as np
import jax
import jax.numpy as jnp
from jax import lax
from jax.experimental import pallas as pl
from jax.experimental.pallas import tpu as pltpu

LEAKY_SLOPE = 0.01   # torch nn.LeakyReLU default
BN_EPS = 1e-5        # torch BatchNorm1d default


def _leaky(x):
    return jnp.where(x >= 0, x, LEAKY_SLOPE * x)


def _bn_stats(x, axis=0):
    mu = jnp.mean(x, axis=axis, keepdims=True)
    var = jnp.mean((x - mu) ** 2, axis=axis, keepdims=True)
    return mu, lax.rsqrt(var + BN_EPS)


def _bn_train(x):
    mu, inv = _bn_stats(x, axis=0)
    return (x - mu) * inv


# ----------------------------------- kernel -----------------------------------
def sac_attention_critic_kernel(
    # inputs (per batch tile)
    obs_ref,       # [A, BT, O]    f32
    act_ref,       # [A, BT, ACT]  f32
    obs_mu_ref,    # [A, 1, O]     f32   full-batch BN mean (obs)
    obs_is_ref,    # [A, 1, O]     f32   full-batch BN 1/sqrt(var+eps) (obs)
    act_mu_ref,    # [A, 1, ACT]   f32
    act_is_ref,    # [A, 1, ACT]   f32
    enc_wo_ref,    # [A, O, H]     bf16  critic_encoder fc1, obs part
    enc_wa_ref,    # [A, ACT, H]   bf16  critic_encoder fc1, act part
    enc_b_ref,     # [A, 1, H]     f32
    senc_w_ref,    # [A, O, H]     bf16  state_encoder fc1
    senc_b_ref,    # [A, 1, H]     f32
    key_w_ref,     # [H, H]        bf16  key extractor (no bias)
    sel_w_ref,     # [H, H]        bf16  selector extractor (no bias)
    val_w_ref,     # [H, H]        bf16  value extractor
    val_b_ref,     # [1, H]        f32
    cr1_ws_ref,    # [A, H, H]     bf16  critic fc1, s_encoding part
    cr1_wo_ref,    # [A, H, H]     bf16  critic fc1, attended-values part
    cr1_b_ref,     # [A, 1, H]     f32
    cr2_w_ref,     # [A, H, ACT]   bf16  critic fc2
    cr2_b_ref,     # [A, 1, ACT]   f32
    # output
    allq_ref,      # [A, BT, ACT]  f32   all Q values (gather happens in the wrapper)
    # scratch (VMEM, sublane-stacked over agents)
    sa_sc,         # [A*BT, H] f32
    s_sc,          # [A*BT, H] f32
    keys_sc,       # [A*BT, H] f32
    vals_sc,       # [A*BT, H] f32
    sels_sc,       # [A*BT, H] f32
    *, A, O, ACT, H, BT,
):
    inv_sqrt_ad = 1.0 / float(np.sqrt(H))  # attend_dim == H (single head)

    # ---- Phase 1: per-agent encoders (BN uses precomputed full-batch stats) ----
    for i in range(A):
        o_bn = (obs_ref[i] - obs_mu_ref[i]) * obs_is_ref[i]    # [BT, O]  f32
        a_bn = (act_ref[i] - act_mu_ref[i]) * act_is_ref[i]    # [BT, ACT] f32
        o_bf = o_bn.astype(jnp.bfloat16)
        a_bf = a_bn.astype(jnp.bfloat16)

        # critic encoder: BN(cat(o, a)) -> Linear -> LeakyReLU
        # (BN is per-feature, so the concat is folded into split weight matmuls)
        sa = _leaky(
            jnp.dot(o_bf, enc_wo_ref[i], preferred_element_type=jnp.float32)
            + jnp.dot(a_bf, enc_wa_ref[i], preferred_element_type=jnp.float32)
            + enc_b_ref[i]
        )
        # state encoder: BN(o) -> Linear -> LeakyReLU
        s = _leaky(
            jnp.dot(o_bf, senc_w_ref[i], preferred_element_type=jnp.float32)
            + senc_b_ref[i]
        )
        sa_sc[pl.ds(i * BT, BT), :] = sa
        s_sc[pl.ds(i * BT, BT), :] = s

    # ---- Phase 2: shared key / value / selector projections, batched over agents ----
    # One [A*BT, H] x [H, H] matmul per projection (weights loaded exactly once).
    sa_bf = sa_sc[...].astype(jnp.bfloat16)
    s_bf = s_sc[...].astype(jnp.bfloat16)
    keys_sc[...] = jnp.dot(sa_bf, key_w_ref[...], preferred_element_type=jnp.float32)
    vals_sc[...] = _leaky(
        jnp.dot(sa_bf, val_w_ref[...], preferred_element_type=jnp.float32)
        + val_b_ref[...]
    )
    sels_sc[...] = jnp.dot(s_bf, sel_w_ref[...], preferred_element_type=jnp.float32)

    # ---- Phase 3: per-agent attention over the other agents + critic head ----
    # (A is small here; list-wise [BT,1] softmax is fine. Pack logits into [BT, A-1]
    #  if A grows beyond a handful of agents.)
    for i in range(A):
        sel = sels_sc[pl.ds(i * BT, BT), :]                    # [BT, H] f32

        logits = []
        for j in range(A):
            if j == i:
                continue
            kj = keys_sc[pl.ds(j * BT, BT), :]
            logits.append(jnp.sum(sel * kj, axis=1, keepdims=True) * inv_sqrt_ad)

        m = logits[0]
        for l in logits[1:]:
            m = jnp.maximum(m, l)
        exps = [jnp.exp(l - m) for l in logits]                # EUP
        denom = exps[0]
        for e in exps[1:]:
            denom = denom + e
        inv_denom = pl.reciprocal(denom, approx=True)          # EUP, off the VALU

        other = None                                           # [BT, H] f32
        k = 0
        for j in range(A):
            if j == i:
                continue
            term = (exps[k] * inv_denom) * vals_sc[pl.ds(j * BT, BT), :]
            other = term if other is None else other + term
            k += 1

        # critic: Linear(2H -> H) -> LeakyReLU -> Linear(H -> ACT)
        # concat(s_enc, other) folded into pre-split weight matmuls.
        s_i_bf = s_sc[pl.ds(i * BT, BT), :].astype(jnp.bfloat16)
        h1 = _leaky(
            jnp.dot(s_i_bf, cr1_ws_ref[i], preferred_element_type=jnp.float32)
            + jnp.dot(other.astype(jnp.bfloat16), cr1_wo_ref[i],
                      preferred_element_type=jnp.float32)
            + cr1_b_ref[i]
        )
        allq_ref[i] = (
            jnp.dot(h1.astype(jnp.bfloat16), cr2_w_ref[i],
                    preferred_element_type=jnp.float32)
            + cr2_b_ref[i]
        )


# ----------------------------------- wrapper -----------------------------------
def _pick_batch_tile(B, target=512):
    if B % 8 != 0:
        return B                       # single full-extent tile (always legal)
    bt = min(B, target)
    bt -= bt % 8
    while B % bt != 0:
        bt -= 8
    return bt


def sac_attention_critic(obs, actions, params, *, bt=None):
    """obs: [A, B, O], actions: [A, B, ACT]; returns q: [A, B, 1] (eval path)."""
    A, B, O = obs.shape
    ACT = actions.shape[2]
    H = params["enc_w"].shape[2]
    if bt is None:
        bt = _pick_batch_tile(B)
    assert B % bt == 0 and (bt % 8 == 0 or bt == B)

    # Full-batch BatchNorm statistics (training-mode semantics of the torch module),
    # hoisted out of the kernel so batch tiling does not change BN results.
    obs_mu, obs_is = _bn_stats(obs, axis=1)        # [A, 1, O]
    act_mu, act_is = _bn_stats(actions, axis=1)    # [A, 1, ACT]

    bf16 = lambda w: w.astype(jnp.bfloat16)
    args = (
        obs, actions, obs_mu, obs_is, act_mu, act_is,
        bf16(params["enc_w"][:, :O, :]), bf16(params["enc_w"][:, O:, :]), params["enc_b"],
        bf16(params["senc_w"]), params["senc_b"],
        bf16(params["key_w"]), bf16(params["sel_w"]), bf16(params["val_w"]), params["val_b"],
        bf16(params["cr1_w"][:, :H, :]), bf16(params["cr1_w"][:, H:, :]), params["cr1_b"],
        bf16(params["cr2_w"]), params["cr2_b"],
    )

    def full_spec(x):
        return pl.BlockSpec(x.shape, lambda b, _n=x.ndim: (0,) * _n)

    in_specs = [
        pl.BlockSpec((A, bt, O), lambda b: (0, b, 0)),     # obs, tiled over batch
        pl.BlockSpec((A, bt, ACT), lambda b: (0, b, 0)),   # actions, tiled over batch
    ] + [full_spec(a) for a in args[2:]]                   # stats + weights: resident

    kernel = functools.partial(sac_attention_critic_kernel,
                               A=A, O=O, ACT=ACT, H=H, BT=bt)

    all_q = pl.pallas_call(
        kernel,
        out_shape=jax.ShapeDtypeStruct((A, B, ACT), jnp.float32),
        grid_spec=pltpu.PrefetchScalarGridSpec(
            num_scalar_prefetch=0,
            grid=(B // bt,),
            in_specs=in_specs,
            out_specs=pl.BlockSpec((A, bt, ACT), lambda b: (0, b, 0)),
            scratch_shapes=[
                pltpu.VMEM((A * bt, H), jnp.float32),   # sa encodings
                pltpu.VMEM((A * bt, H), jnp.float32),   # s  encodings
                pltpu.VMEM((A * bt, H), jnp.float32),   # keys
                pltpu.VMEM((A * bt, H), jnp.float32),   # values
                pltpu.VMEM((A * bt, H), jnp.float32),   # selectors
            ],
        ),
        compiler_params=pltpu.CompilerParams(
            dimension_semantics=("parallel",),          # batch tiles are independent
            vmem_limit_bytes=32 * 1024 * 1024,          # fits v7x's 64 MiB with headroom
        ),
    )(*args)

    # q = all_q.gather(1, actions.argmax(dim=1, keepdim=True)) — done lane-dense,
    # outside the kernel; jnp.argmax matches torch first-occurrence tie-breaking.
    idx = jnp.argmax(actions, axis=2)                                   # [A, B]
    return jnp.take_along_axis(all_q, idx[..., None], axis=2)           # [A, B, 1]


# ------------------- parameter init (deterministic, synthetic) -------------------
def init_params(key, A, O, ACT, H):
    def lin(k, fan_in, shape):
        bound = 1.0 / np.sqrt(fan_in)
        return jax.random.uniform(k, shape, jnp.float32, -bound, bound)

    ks = jax.random.split(key, 12)
    IN = O + ACT
    return {
        "enc_w":  lin(ks[0], IN, (A, IN, H)),
        "enc_b":  lin(ks[1], IN, (A, 1, H)),
        "senc_w": lin(ks[2], O, (A, O, H)),
        "senc_b": lin(ks[3], O, (A, 1, H)),
        "key_w":  lin(ks[4], H, (H, H)),
        "sel_w":  lin(ks[5], H, (H, H)),
        "val_w":  lin(ks[6], H, (H, H)),
        "val_b":  lin(ks[7], H, (1, H)),
        "cr1_w":  lin(ks[8], 2 * H, (A, 2 * H, H)),
        "cr1_b":  lin(ks[9], 2 * H, (A, 1, H)),
        "cr2_w":  lin(ks[10], H, (A, H, ACT)),
        "cr2_b":  lin(ks[11], H, (A, 1, ACT)),
    }


# -------- plain-JAX reference (mirrors the torch code; matmul operands bf16 to match
# -------- the kernel's MXU input precision, accumulation f32) --------
def reference_forward(obs, actions, params):
    A, B, O = obs.shape
    H = params["enc_w"].shape[2]

    def mm(x, w):
        return jnp.dot(x.astype(jnp.bfloat16), w.astype(jnp.bfloat16),
                       preferred_element_type=jnp.float32)

    sa_encs, s_encs = [], []
    for i in range(A):
        inp = jnp.concatenate([obs[i], actions[i]], axis=1)
        sa = _leaky(mm(_bn_train(inp), params["enc_w"][i]) + params["enc_b"][i][0])
        s = _leaky(mm(_bn_train(obs[i]), params["senc_w"][i]) + params["senc_b"][i][0])
        sa_encs.append(sa)
        s_encs.append(s)
    keys = [mm(sa, params["key_w"]) for sa in sa_encs]
    vals = [_leaky(mm(sa, params["val_w"]) + params["val_b"][0]) for sa in sa_encs]
    sels = [mm(s, params["sel_w"]) for s in s_encs]
    qs = []
    for i in range(A):
        ks = jnp.stack([keys[j] for j in range(A) if j != i], axis=0)  # [A-1, B, H]
        vs = jnp.stack([vals[j] for j in range(A) if j != i], axis=0)
        logits = jnp.einsum("bd,nbd->bn", sels[i], ks) / np.sqrt(H)
        w = jax.nn.softmax(logits, axis=1)
        other = jnp.einsum("bn,nbd->bd", w, vs)
        cin = jnp.concatenate([s_encs[i], other], axis=1)
        h1 = _leaky(mm(cin, params["cr1_w"][i]) + params["cr1_b"][i][0])
        all_q = mm(h1, params["cr2_w"][i]) + params["cr2_b"][i][0]
        idx = jnp.argmax(actions[i], axis=1)
        qs.append(jnp.take_along_axis(all_q, idx[:, None], axis=1))
    return jnp.stack(qs, axis=0)


if __name__ == "__main__":
    # small shapes consistent with the module: 3 agents, batch 16, obs 10, action 5,
    # hidden 32, 1 head; bt=8 -> grid of 2 batch tiles to exercise the pipeline.
    A, B, O, ACT, H = 3, 16, 10, 5, 32
    key = jax.random.PRNGKey(0)
    k_obs, k_act, k_par = jax.random.split(key, 3)
    obs = jax.random.normal(k_obs, (A, B, O), jnp.float32)
    actions = jax.random.uniform(k_act, (A, B, ACT), jnp.float32)
    params = init_params(k_par, A, O, ACT, H)

    q = sac_attention_critic(obs, actions, params, bt=8)
    q = jax.block_until_ready(q)

    q_ref = reference_forward(obs, actions, params)
    # tolerance covers the approximate EUP reciprocal in the softmax; bf16 matmul
    # rounding is matched by the reference.
    np.testing.assert_allclose(np.asarray(q), np.asarray(q_ref), rtol=5e-3, atol=5e-3)

    # TODO(synk): train-mode extras (attend-logit L2 regularizer, attention-entropy
    # logging, return_all_q list packaging) are host-side diagnostics on detached
    # tensors and are not part of this kernel.
    print("KERNEL_OK")
</pallas_src>

<mosaic_0001>
module attributes {stable_mosaic.version = 11 : i64} {
  func.func @sac_attention_critic_kernel(%arg0: i32, %arg1: memref<3x8x10xf32, #tpu.memory_space<vmem>>, %arg2: memref<3x8x5xf32, #tpu.memory_space<vmem>>, %arg3: memref<3x1x10xf32, #tpu.memory_space<vmem>>, %arg4: memref<3x1x10xf32, #tpu.memory_space<vmem>>, %arg5: memref<3x1x5xf32, #tpu.memory_space<vmem>>, %arg6: memref<3x1x5xf32, #tpu.memory_space<vmem>>, %arg7: memref<3x10x32xbf16, #tpu.memory_space<vmem>>, %arg8: memref<3x5x32xbf16, #tpu.memory_space<vmem>>, %arg9: memref<3x1x32xf32, #tpu.memory_space<vmem>>, %arg10: memref<3x10x32xbf16, #tpu.memory_space<vmem>>, %arg11: memref<3x1x32xf32, #tpu.memory_space<vmem>>, %arg12: memref<32x32xbf16, #tpu.memory_space<vmem>>, %arg13: memref<32x32xbf16, #tpu.memory_space<vmem>>, %arg14: memref<32x32xbf16, #tpu.memory_space<vmem>>, %arg15: memref<1x32xf32, #tpu.memory_space<vmem>>, %arg16: memref<3x32x32xbf16, #tpu.memory_space<vmem>>, %arg17: memref<3x32x32xbf16, #tpu.memory_space<vmem>>, %arg18: memref<3x1x32xf32, #tpu.memory_space<vmem>>, %arg19: memref<3x32x5xbf16, #tpu.memory_space<vmem>>, %arg20: memref<3x1x5xf32, #tpu.memory_space<vmem>>, %arg21: memref<3x8x5xf32, #tpu.memory_space<vmem>>, %arg22: memref<24x32xf32, #tpu.memory_space<vmem>>, %arg23: memref<24x32xf32, #tpu.memory_space<vmem>>, %arg24: memref<24x32xf32, #tpu.memory_space<vmem>>, %arg25: memref<24x32xf32, #tpu.memory_space<vmem>>, %arg26: memref<24x32xf32, #tpu.memory_space<vmem>>) attributes {dimension_semantics = [#tpu.dimension_semantics<parallel>], iteration_bounds = array<i64: 2>, scalar_prefetch = 0 : i64, scratch_operands = 5 : i64, tpu.core_type = #tpu.core_type<tc>, window_params = [{transform_indices = @transform_0, window_bounds = array<i64: 3, 8, 10>}, {transform_indices = @transform_1, window_bounds = array<i64: 3, 8, 5>}, {pipeline_mode = #tpu.pipeline_mode<synchronous>, transform_indices = @transform_2, window_bounds = array<i64: 3, 1, 10>}, {pipeline_mode = #tpu.pipeline_mode<synchronous>, transform_indices = @transform_3, window_bounds = array<i64: 3, 1, 10>}, {pipeline_mode = #tpu.pipeline_mode<synchronous>, transform_indices = @transform_4, window_bounds = array<i64: 3, 1, 5>}, {pipeline_mode = #tpu.pipeline_mode<synchronous>, transform_indices = @transform_5, window_bounds = array<i64: 3, 1, 5>}, {pipeline_mode = #tpu.pipeline_mode<synchronous>, transform_indices = @transform_6, window_bounds = array<i64: 3, 10, 32>}, {pipeline_mode = #tpu.pipeline_mode<synchronous>, transform_indices = @transform_7, window_bounds = array<i64: 3, 5, 32>}, {pipeline_mode = #tpu.pipeline_mode<synchronous>, transform_indices = @transform_8, window_bounds = array<i64: 3, 1, 32>}, {pipeline_mode = #tpu.pipeline_mode<synchronous>, transform_indices = @transform_9, window_bounds = array<i64: 3, 10, 32>}, {pipeline_mode = #tpu.pipeline_mode<synchronous>, transform_indices = @transform_10, window_bounds = array<i64: 3, 1, 32>}, {pipeline_mode = #tpu.pipeline_mode<synchronous>, transform_indices = @transform_11, window_bounds = array<i64: 32, 32>}, {pipeline_mode = #tpu.pipeline_mode<synchronous>, transform_indices = @transform_12, window_bounds = array<i64: 32, 32>}, {pipeline_mode = #tpu.pipeline_mode<synchronous>, transform_indices = @transform_13, window_bounds = array<i64: 32, 32>}, {pipeline_mode = #tpu.pipeline_mode<synchronous>, transform_indices = @transform_14, window_bounds = array<i64: 1, 32>}, {pipeline_mode = #tpu.pipeline_mode<synchronous>, transform_indices = @transform_15, window_bounds = array<i64: 3, 32, 32>}, {pipeline_mode = #tpu.pipeline_mode<synchronous>, transform_indices = @transform_16, window_bounds = array<i64: 3, 32, 32>}, {pipeline_mode = #tpu.pipeline_mode<synchronous>, transform_indices = @transform_17, window_bounds = array<i64: 3, 1, 32>}, {pipeline_mode = #tpu.pipeline_mode<synchronous>, transform_indices = @transform_18, window_bounds = array<i64: 3, 32, 5>}, {pipeline_mode = #tpu.pipeline_mode<synchronous>, transform_indices = @transform_19, window_bounds = array<i64: 3, 1, 5>}, {transform_indices = @transform_20, window_bounds = array<i64: 3, 8, 5>}]} {
    %c0 = arith.constant 0 : index
    %c0_0 = arith.constant 0 : index
    %c0_1 = arith.constant 0 : index
    %0 = vector.load %arg1[%c0, %c0_0, %c0_1] : memref<3x8x10xf32, #tpu.memory_space<vmem>>, vector<1x8x10xf32>
    %1 = vector.shape_cast %0 : vector<1x8x10xf32> to vector<8x10xf32>
    %c0_2 = arith.constant 0 : index
    %c0_3 = arith.constant 0 : index
    %c0_4 = arith.constant 0 : index
    %2 = vector.load %arg3[%c0_2, %c0_3, %c0_4] : memref<3x1x10xf32, #tpu.memory_space<vmem>>, vector<1x1x10xf32>
    %3 = vector.shape_cast %2 : vector<1x1x10xf32> to vector<1x10xf32>
    %4 = vector.broadcast %3 : vector<1x10xf32> to vector<8x10xf32>
    %5 = arith.subf %1, %4 : vector<8x10xf32>
    %c0_5 = arith.constant 0 : index
    %c0_6 = arith.constant 0 : index
    %c0_7 = arith.constant 0 : index
    %6 = vector.load %arg4[%c0_5, %c0_6, %c0_7] : memref<3x1x10xf32, #tpu.memory_space<vmem>>, vector<1x1x10xf32>
    %7 = vector.shape_cast %6 : vector<1x1x10xf32> to vector<1x10xf32>
    %8 = vector.broadcast %7 : vector<1x10xf32> to vector<8x10xf32>
    %9 = arith.mulf %5, %8 : vector<8x10xf32>
    %c0_8 = arith.constant 0 : index
    %c0_9 = arith.constant 0 : index
    %c0_10 = arith.constant 0 : index
    %10 = vector.load %arg2[%c0_8, %c0_9, %c0_10] : memref<3x8x5xf32, #tpu.memory_space<vmem>>, vector<1x8x5xf32>
    %11 = vector.shape_cast %10 : vector<1x8x5xf32> to vector<8x5xf32>
    %c0_11 = arith.constant 0 : index
    %c0_12 = arith.constant 0 : index
    %c0_13 = arith.constant 0 : index
    %12 = vector.load %arg5[%c0_11, %c0_12, %c0_13] : memref<3x1x5xf32, #tpu.memory_space<vmem>>, vector<1x1x5xf32>
    %13 = vector.shape_cast %12 : vector<1x1x5xf32> to vector<1x5xf32>
    %14 = vector.broadcast %13 : vector<1x5xf32> to vector<8x5xf32>
    %15 = arith.subf %11, %14 : vector<8x5xf32>
    %c0_14 = arith.constant 0 : index
    %c0_15 = arith.constant 0 : index
    %c0_16 = arith.constant 0 : index
    %16 = vector.load %arg6[%c0_14, %c0_15, %c0_16] : memref<3x1x5xf32, #tpu.memory_space<vmem>>, vector<1x1x5xf32>
    %17 = vector.shape_cast %16 : vector<1x1x5xf32> to vector<1x5xf32>
    %18 = vector.broadcast %17 : vector<1x5xf32> to vector<8x5xf32>
    %19 = arith.mulf %15, %18 : vector<8x5xf32>
    %20 = arith.truncf %9 : vector<8x10xf32> to vector<8x10xbf16>
    %21 = arith.truncf %19 : vector<8x5xf32> to vector<8x5xbf16>
    %c0_17 = arith.constant 0 : index
    %c0_18 = arith.constant 0 : index
    %c0_19 = arith.constant 0 : index
    %22 = vector.load %arg7[%c0_17, %c0_18, %c0_19] : memref<3x10x32xbf16, #tpu.memory_space<vmem>>, vector<1x10x32xbf16>
    %23 = vector.shape_cast %22 : vector<1x10x32xbf16> to vector<10x32xbf16>
    %cst = arith.constant dense<0.000000e+00> : vector<8x32xf32>
    %24 = tpu.matmul %20, %23, %cst {dimension_numbers = #tpu.dot_dimension_numbers<[1], [0], [0], [1], [0, 0, 1, 1], [], []>} : vector<8x10xbf16>, vector<10x32xbf16>, vector<8x32xf32> -> vector<8x32xf32>
    %c0_20 = arith.constant 0 : index
    %c0_21 = arith.constant 0 : index
    %c0_22 = arith.constant 0 : index
    %25 = vector.load %arg8[%c0_20, %c0_21, %c0_22] : memref<3x5x32xbf16, #tpu.memory_space<vmem>>, vector<1x5x32xbf16>
    %26 = vector.shape_cast %25 : vector<1x5x32xbf16> to vector<5x32xbf16>
    %cst_23 = arith.constant dense<0.000000e+00> : vector<8x32xf32>
    %27 = tpu.matmul %21, %26, %cst_23 {dimension_numbers = #tpu.dot_dimension_numbers<[1], [0], [0], [1], [0, 0, 1, 1], [], []>} : vector<8x5xbf16>, vector<5x32xbf16>, vector<8x32xf32> -> vector<8x32xf32>
    %28 = arith.addf %24, %27 : vector<8x32xf32>
    %c0_24 = arith.constant 0 : index
    %c0_25 = arith.constant 0 : index
    %c0_26 = arith.constant 0 : index
    %29 = vector.load %arg9[%c0_24, %c0_25, %c0_26] : memref<3x1x32xf32, #tpu.memory_space<vmem>>, vector<1x1x32xf32>
    %30 = vector.shape_cast %29 : vector<1x1x32xf32> to vector<1x32xf32>
    %31 = vector.broadcast %30 : vector<1x32xf32> to vector<8x32xf32>
    %32 = arith.addf %28, %31 : vector<8x32xf32>
    %cst_27 = arith.constant 0.000000e+00 : f32
    %33 = vector.broadcast %cst_27 : f32 to vector<8x32xf32>
    %34 = arith.cmpf oge, %32, %33 : vector<8x32xf32>
    %cst_28 = arith.constant 0.00999999977 : f32
    %35 = vector.broadcast %cst_28 : f32 to vector<8x32xf32>
    %36 = arith.mulf %35, %32 : vector<8x32xf32>
    %37 = arith.select %34, %32, %36 : vector<8x32xi1>, vector<8x32xf32>
    %c0_29 = arith.constant 0 : index
    %c0_30 = arith.constant 0 : index
    %c0_31 = arith.constant 0 : index
    %38 = vector.load %arg10[%c0_29, %c0_30, %c0_31] : memref<3x10x32xbf16, #tpu.memory_space<vmem>>, vector<1x10x32xbf16>
    %39 = vector.shape_cast %38 : vector<1x10x32xbf16> to vector<10x32xbf16>
    %cst_32 = arith.constant dense<0.000000e+00> : vector<8x32xf32>
    %40 = tpu.matmul %20, %39, %cst_32 {dimension_numbers = #tpu.dot_dimension_numbers<[1], [0], [0], [1], [0, 0, 1, 1], [], []>} : vector<8x10xbf16>, vector<10x32xbf16>, vector<8x32xf32> -> vector<8x32xf32>
    %c0_33 = arith.constant 0 : index
    %c0_34 = arith.constant 0 : index
    %c0_35 = arith.constant 0 : index
    %41 = vector.load %arg11[%c0_33, %c0_34, %c0_35] : memref<3x1x32xf32, #tpu.memory_space<vmem>>, vector<1x1x32xf32>
    %42 = vector.shape_cast %41 : vector<1x1x32xf32> to vector<1x32xf32>
    %43 = vector.broadcast %42 : vector<1x32xf32> to vector<8x32xf32>
    %44 = arith.addf %40, %43 : vector<8x32xf32>
    %cst_36 = arith.constant 0.000000e+00 : f32
    %45 = vector.broadcast %cst_36 : f32 to vector<8x32xf32>
    %46 = arith.cmpf oge, %44, %45 : vector<8x32xf32>
    %cst_37 = arith.constant 0.00999999977 : f32
    %47 = vector.broadcast %cst_37 : f32 to vector<8x32xf32>
    %48 = arith.mulf %47, %44 : vector<8x32xf32>
    %49 = arith.select %46, %44, %48 : vector<8x32xi1>, vector<8x32xf32>
    %c0_38 = arith.constant 0 : index
    %c0_39 = arith.constant 0 : index
    %50 = vector.load %arg22[%c0_38, %c0_39] : memref<24x32xf32, #tpu.memory_space<vmem>>, vector<8x32xf32>
    tpu.vector_store %arg22[%c0_38, %c0_39], %37 {strides = array<i32>} : memref<24x32xf32, #tpu.memory_space<vmem>>, vector<8x32xf32>,
    %c0_40 = arith.constant 0 : index
    %c0_41 = arith.constant 0 : index
    %51 = vector.load %arg23[%c0_40, %c0_41] : memref<24x32xf32, #tpu.memory_space<vmem>>, vector<8x32xf32>
    tpu.vector_store %arg23[%c0_40, %c0_41], %49 {strides = array<i32>} : memref<24x32xf32, #tpu.memory_space<vmem>>, vector<8x32xf32>,
    %c1 = arith.constant 1 : index
    %c0_42 = arith.constant 0 : index
    %c0_43 = arith.constant 0 : index
    %52 = vector.load %arg1[%c1, %c0_42, %c0_43] : memref<3x8x10xf32, #tpu.memory_space<vmem>>, vector<1x8x10xf32>
    %53 = vector.shape_cast %52 : vector<1x8x10xf32> to vector<8x10xf32>
    %c1_44 = arith.constant 1 : index
    %c0_45 = arith.constant 0 : index
    %c0_46 = arith.constant 0 : index
    %54 = vector.load %arg3[%c1_44, %c0_45, %c0_46] : memref<3x1x10xf32, #tpu.memory_space<vmem>>, vector<1x1x10xf32>
    %55 = vector.shape_cast %54 : vector<1x1x10xf32> to vector<1x10xf32>
    %56 = vector.broadcast %55 : vector<1x10xf32> to vector<8x10xf32>
    %57 = arith.subf %53, %56 : vector<8x10xf32>
    %c1_47 = arith.constant 1 : index
    %c0_48 = arith.constant 0 : index
    %c0_49 = arith.constant 0 : index
    %58 = vector.load %arg4[%c1_47, %c0_48, %c0_49] : memref<3x1x10xf32, #tpu.memory_space<vmem>>, vector<1x1x10xf32>
    %59 = vector.shape_cast %58 : vector<1x1x10xf32> to vector<1x10xf32>
    %60 = vector.broadcast %59 : vector<1x10xf32> to vector<8x10xf32>
    %61 = arith.mulf %57, %60 : vector<8x10xf32>
    %c1_50 = arith.constant 1 : index
    %c0_51 = arith.constant 0 : index
    %c0_52 = arith.constant 0 : index
    %62 = vector.load %arg2[%c1_50, %c0_51, %c0_52] : memref<3x8x5xf32, #tpu.memory_space<vmem>>, vector<1x8x5xf32>
    %63 = vector.shape_cast %62 : vector<1x8x5xf32> to vector<8x5xf32>
    %c1_53 = arith.constant 1 : index
    %c0_54 = arith.constant 0 : index
    %c0_55 = arith.constant 0 : index
    %64 = vector.load %arg5[%c1_53, %c0_54, %c0_55] : memref<3x1x5xf32, #tpu.memory_space<vmem>>, vector<1x1x5xf32>
    %65 = vector.shape_cast %64 : vector<1x1x5xf32> to vector<1x5xf32>
    %66 = vector.broadcast %65 : vector<1x5xf32> to vector<8x5xf32>
    %67 = arith.subf %63, %66 : vector<8x5xf32>
    %c1_56 = arith.constant 1 : index
    %c0_57 = arith.constant 0 : index
    %c0_58 = arith.constant 0 : index
    %68 = vector.load %arg6[%c1_56, %c0_57, %c0_58] : memref<3x1x5xf32, #tpu.memory_space<vmem>>, vector<1x1x5xf32>
    %69 = vector.shape_cast %68 : vector<1x1x5xf32> to vector<1x5xf32>
    %70 = vector.broadcast %69 : vector<1x5xf32> to vector<8x5xf32>
    %71 = arith.mulf %67, %70 : vector<8x5xf32>
    %72 = arith.truncf %61 : vector<8x10xf32> to vector<8x10xbf16>
    %73 = arith.truncf %71 : vector<8x5xf32> to vector<8x5xbf16>
    %c1_59 = arith.constant 1 : index
    %c0_60 = arith.constant 0 : index
    %c0_61 = arith.constant 0 : index
    %74 = vector.load %arg7[%c1_59, %c0_60, %c0_61] : memref<3x10x32xbf16, #tpu.memory_space<vmem>>, vector<1x10x32xbf16>
    %75 = vector.shape_cast %74 : vector<1x10x32xbf16> to vector<10x32xbf16>
    %cst_62 = arith.constant dense<0.000000e+00> : vector<8x32xf32>
    %76 = tpu.matmul %72, %75, %cst_62 {dimension_numbers = #tpu.dot_dimension_numbers<[1], [0], [0], [1], [0, 0, 1, 1], [], []>} : vector<8x10xbf16>, vector<10x32xbf16>, vector<8x32xf32> -> vector<8x32xf32>
    %c1_63 = arith.constant 1 : index
    %c0_64 = arith.constant 0 : index
    %c0_65 = arith.constant 0 : index
    %77 = vector.load %arg8[%c1_63, %c0_64, %c0_65] : memref<3x5x32xbf16, #tpu.memory_space<vmem>>, vector<1x5x32xbf16>
    %78 = vector.shape_cast %77 : vector<1x5x32xbf16> to vector<5x32xbf16>
    %cst_66 = arith.constant dense<0.000000e+00> : vector<8x32xf32>
    %79 = tpu.matmul %73, %78, %cst_66 {dimension_numbers = #tpu.dot_dimension_numbers<[1], [0], [0], [1], [0, 0, 1, 1], [], []>} : vector<8x5xbf16>, vector<5x32xbf16>, vector<8x32xf32> -> vector<8x32xf32>
    %80 = arith.addf %76, %79 : vector<8x32xf32>
    %c1_67 = arith.constant 1 : index
    %c0_68 = arith.constant 0 : index
    %c0_69 = arith.constant 0 : index
    %81 = vector.load %arg9[%c1_67, %c0_68, %c0_69] : memref<3x1x32xf32, #tpu.memory_space<vmem>>, vector<1x1x32xf32>
    %82 = vector.shape_cast %81 : vector<1x1x32xf32> to vector<1x32xf32>
    %83 = vector.broadcast %82 : vector<1x32xf32> to vector<8x32xf32>
    %84 = arith.addf %80, %83 : vector<8x32xf32>
    %cst_70 = arith.constant 0.000000e+00 : f32
    %85 = vector.broadcast %cst_70 : f32 to vector<8x32xf32>
    %86 = arith.cmpf oge, %84, %85 : vector<8x32xf32>
    %cst_71 = arith.constant 0.00999999977 : f32
    %87 = vector.broadcast %cst_71 : f32 to vector<8x32xf32>
    %88 = arith.mulf %87, %84 : vector<8x32xf32>
    %89 = arith.select %86, %84, %88 : vector<8x32xi1>, vector<8x32xf32>
    %c1_72 = arith.constant 1 : index
    %c0_73 = arith.constant 0 : index
    %c0_74 = arith.constant 0 : index
    %90 = vector.load %arg10[%c1_72, %c0_73, %c0_74] : memref<3x10x32xbf16, #tpu.memory_space<vmem>>, vector<1x10x32xbf16>
    %91 = vector.shape_cast %90 : vector<1x10x32xbf16> to vector<10x32xbf16>
    %cst_75 = arith.constant dense<0.000000e+00> : vector<8x32xf32>
    %92 = tpu.matmul %72, %91, %cst_75 {dimension_numbers = #tpu.dot_dimension_numbers<[1], [0], [0], [1], [0, 0, 1, 1], [], []>} : vector<8x10xbf16>, vector<10x32xbf16>, vector<8x32xf32> -> vector<8x32xf32>
    %c1_76 = arith.constant 1 : index
    %c0_77 = arith.constant 0 : index
    %c0_78 = arith.constant 0 : index
    %93 = vector.load %arg11[%c1_76, %c0_77, %c0_78] : memref<3x1x32xf32, #tpu.memory_space<vmem>>, vector<1x1x32xf32>
    %94 = vector.shape_cast %93 : vector<1x1x32xf32> to vector<1x32xf32>
    %95 = vector.broadcast %94 : vector<1x32xf32> to vector<8x32xf32>
    %96 = arith.addf %92, %95 : vector<8x32xf32>
    %cst_79 = arith.constant 0.000000e+00 : f32
    %97 = vector.broadcast %cst_79 : f32 to vector<8x32xf32>
    %98 = arith.cmpf oge, %96, %97 : vector<8x32xf32>
    %cst_80 = arith.constant 0.00999999977 : f32
    %99 = vector.broadcast %cst_80 : f32 to vector<8x32xf32>
    %100 = arith.mulf %99, %96 : vector<8x32xf32>
    %101 = arith.select %98, %96, %100 : vector<8x32xi1>, vector<8x32xf32>
    %c8 = arith.constant 8 : index
    %c0_81 = arith.constant 0 : index
    %102 = vector.load %arg22[%c8, %c0_81] : memref<24x32xf32, #tpu.memory_space<vmem>>, vector<8x32xf32>
    tpu.vector_store %arg22[%c8, %c0_81], %89 {strides = array<i32>} : memref<24x32xf32, #tpu.memory_space<vmem>>, vector<8x32xf32>,
    %c8_82 = arith.constant 8 : index
    %c0_83 = arith.constant 0 : index
    %103 = vector.load %arg23[%c8_82, %c0_83] : memref<24x32xf32, #tpu.memory_space<vmem>>, vector<8x32xf32>
    tpu.vector_store %arg23[%c8_82, %c0_83], %101 {strides = array<i32>} : memref<24x32xf32, #tpu.memory_space<vmem>>, vector<8x32xf32>,
    %c2 = arith.constant 2 : index
    %c0_84 = arith.constant 0 : index
    %c0_85 = arith.constant 0 : index
    %104 = vector.load %arg1[%c2, %c0_84, %c0_85] : memref<3x8x10xf32, #tpu.memory_space<vmem>>, vector<1x8x10xf32>
    %105 = vector.shape_cast %104 : vector<1x8x10xf32> to vector<8x10xf32>
    %c2_86 = arith.constant 2 : index
    %c0_87 = arith.constant 0 : index
    %c0_88 = arith.constant 0 : index
    %106 = vector.load %arg3[%c2_86, %c0_87, %c0_88] : memref<3x1x10xf32, #tpu.memory_space<vmem>>, vector<1x1x10xf32>
    %107 = vector.shape_cast %106 : vector<1x1x10xf32> to vector<1x10xf32>
    %108 = vector.broadcast %107 : vector<1x10xf32> to vector<8x10xf32>
    %109 = arith.subf %105, %108 : vector<8x10xf32>
    %c2_89 = arith.constant 2 : index
    %c0_90 = arith.constant 0 : index
    %c0_91 = arith.constant 0 : index
    %110 = vector.load %arg4[%c2_89, %c0_90, %c0_91] : memref<3x1x10xf32, #tpu.memory_space<vmem>>, vector<1x1x10xf32>
    %111 = vector.shape_cast %110 : vector<1x1x10xf32> to vector<1x10xf32>
    %112 = vector.broadcast %111 : vector<1x10xf32> to vector<8x10xf32>
    %113 = arith.mulf %109, %112 : vector<8x10xf32>
    %c2_92 = arith.constant 2 : index
    %c0_93 = arith.constant 0 : index
    %c0_94 = arith.constant 0 : index
    %114 = vector.load %arg2[%c2_92, %c0_93, %c0_94] : memref<3x8x5xf32, #tpu.memory_space<vmem>>, vector<1x8x5xf32>
    %115 = vector.shape_cast %114 : vector<1x8x5xf32> to vector<8x5xf32>
    %c2_95 = arith.constant 2 : index
    %c0_96 = arith.constant 0 : index
    %c0_97 = arith.constant 0 : index
    %116 = vector.load %arg5[%c2_95, %c0_96, %c0_97] : memref<3x1x5xf32, #tpu.memory_space<vmem>>, vector<1x1x5xf32>
    %117 = vector.shape_cast %116 : vector<1x1x5xf32> to vector<1x5xf32>
    %118 = vector.broadcast %117 : vector<1x5xf32> to vector<8x5xf32>
    %119 = arith.subf %115, %118 : vector<8x5xf32>
    %c2_98 = arith.constant 2 : index
    %c0_99 = arith.constant 0 : index
    %c0_100 = arith.constant 0 : index
    %120 = vector.load %arg6[%c2_98, %c0_99, %c0_100] : memref<3x1x5xf32, #tpu.memory_space<vmem>>, vector<1x1x5xf32>
    %121 = vector.shape_cast %120 : vector<1x1x5xf32> to vector<1x5xf32>
    %122 = vector.broadcast %121 : vector<1x5xf32> to vector<8x5xf32>
    %123 = arith.mulf %119, %122 : vector<8x5xf32>
    %124 = arith.truncf %113 : vector<8x10xf32> to vector<8x10xbf16>
    %125 = arith.truncf %123 : vector<8x5xf32> to vector<8x5xbf16>
    %c2_101 = arith.constant 2 : index
    %c0_102 = arith.constant 0 : index
    %c0_103 = arith.constant 0 : index
    %126 = vector.load %arg7[%c2_101, %c0_102, %c0_103] : memref<3x10x32xbf16, #tpu.memory_space<vmem>>, vector<1x10x32xbf16>
    %127 = vector.shape_cast %126 : vector<1x10x32xbf16> to vector<10x32xbf16>
    %cst_104 = arith.constant dense<0.000000e+00> : vector<8x32xf32>
    %128 = tpu.matmul %124, %127, %cst_104 {dimension_numbers = #tpu.dot_dimension_numbers<[1], [0], [0], [1], [0, 0, 1, 1], [], []>} : vector<8x10xbf16>, vector<10x32xbf16>, vector<8x32xf32> -> vector<8x32xf32>
    %c2_105 = arith.constant 2 : index
    %c0_106 = arith.constant 0 : index
    %c0_107 = arith.constant 0 : index
    %129 = vector.load %arg8[%c2_105, %c0_106, %c0_107] : memref<3x5x32xbf16, #tpu.memory_space<vmem>>, vector<1x5x32xbf16>
    %130 = vector.shape_cast %129 : vector<1x5x32xbf16> to vector<5x32xbf16>
    %cst_108 = arith.constant dense<0.000000e+00> : vector<8x32xf32>
    %131 = tpu.matmul %125, %130, %cst_108 {dimension_numbers = #tpu.dot_dimension_numbers<[1], [0], [0], [1], [0, 0, 1, 1], [], []>} : vector<8x5xbf16>, vector<5x32xbf16>, vector<8x32xf32> -> vector<8x32xf32>
    %132 = arith.addf %128, %131 : vector<8x32xf32>
    %c2_109 = arith.constant 2 : index
    %c0_110 = arith.constant 0 : index
    %c0_111 = arith.constant 0 : index
    %133 = vector.load %arg9[%c2_109, %c0_110, %c0_111] : memref<3x1x32xf32, #tpu.memory_space<vmem>>, vector<1x1x32xf32>
    %134 = vector.shape_cast %133 : vector<1x1x32xf32> to vector<1x32xf32>
    %135 = vector.broadcast %134 : vector<1x32xf32> to vector<8x32xf32>
    %136 = arith.addf %132, %135 : vector<8x32xf32>
    %cst_112 = arith.constant 0.000000e+00 : f32
    %137 = vector.broadcast %cst_112 : f32 to vector<8x32xf32>
    %138 = arith.cmpf oge, %136, %137 : vector<8x32xf32>
    %cst_113 = arith.constant 0.00999999977 : f32
    %139 = vector.broadcast %cst_113 : f32 to vector<8x32xf32>
    %140 = arith.mulf %139, %136 : vector<8x32xf32>
    %141 = arith.select %138, %136, %140 : vector<8x32xi1>, vector<8x32xf32>
    %c2_114 = arith.constant 2 : index
    %c0_115 = arith.constant 0 : index
    %c0_116 = arith.constant 0 : index
    %142 = vector.load %arg10[%c2_114, %c0_115, %c0_116] : memref<3x10x32xbf16, #tpu.memory_space<vmem>>, vector<1x10x32xbf16>
    %143 = vector.shape_cast %142 : vector<1x10x32xbf16> to vector<10x32xbf16>
    %cst_117 = arith.constant dense<0.000000e+00> : vector<8x32xf32>
    %144 = tpu.matmul %124, %143, %cst_117 {dimension_numbers = #tpu.dot_dimension_numbers<[1], [0], [0], [1], [0, 0, 1, 1], [], []>} : vector<8x10xbf16>, vector<10x32xbf16>, vector<8x32xf32> -> vector<8x32xf32>
    %c2_118 = arith.constant 2 : index
    %c0_119 = arith.constant 0 : index
    %c0_120 = arith.constant 0 : index
    %145 = vector.load %arg11[%c2_118, %c0_119, %c0_120] : memref<3x1x32xf32, #tpu.memory_space<vmem>>, vector<1x1x32xf32>
    %146 = vector.shape_cast %145 : vector<1x1x32xf32> to vector<1x32xf32>
    %147 = vector.broadcast %146 : vector<1x32xf32> to vector<8x32xf32>
    %148 = arith.addf %144, %147 : vector<8x32xf32>
    %cst_121 = arith.constant 0.000000e+00 : f32
    %149 = vector.broadcast %cst_121 : f32 to vector<8x32xf32>
    %150 = arith.cmpf oge, %148, %149 : vector<8x32xf32>
    %cst_122 = arith.constant 0.00999999977 : f32
    %151 = vector.broadcast %cst_122 : f32 to vector<8x32xf32>
    %152 = arith.mulf %151, %148 : vector<8x32xf32>
    %153 = arith.select %150, %148, %152 : vector<8x32xi1>, vector<8x32xf32>
    %c16 = arith.constant 16 : index
    %c0_123 = arith.constant 0 : index
    %154 = vector.load %arg22[%c16, %c0_123] : memref<24x32xf32, #tpu.memory_space<vmem>>, vector<8x32xf32>
    tpu.vector_store %arg22[%c16, %c0_123], %141 {strides = array<i32>} : memref<24x32xf32, #tpu.memory_space<vmem>>, vector<8x32xf32>,
    %c16_124 = arith.constant 16 : index
    %c0_125 = arith.constant 0 : index
    %155 = vector.load %arg23[%c16_124, %c0_125] : memref<24x32xf32, #tpu.memory_space<vmem>>, vector<8x32xf32>
    tpu.vector_store %arg23[%c16_124, %c0_125], %153 {strides = array<i32>} : memref<24x32xf32, #tpu.memory_space<vmem>>, vector<8x32xf32>,
    %c0_126 = arith.constant 0 : index
    %c0_127 = arith.constant 0 : index
    %156 = vector.load %arg22[%c0_126, %c0_127] : memref<24x32xf32, #tpu.memory_space<vmem>>, vector<24x32xf32>
    %157 = arith.truncf %156 : vector<24x32xf32> to vector<24x32xbf16>
    %c0_128 = arith.constant 0 : index
    %c0_129 = arith.constant 0 : index
    %158 = vector.load %arg23[%c0_128, %c0_129] : memref<24x32xf32, #tpu.memory_space<vmem>>, vector<24x32xf32>
    %159 = arith.truncf %158 : vector<24x32xf32> to vector<24x32xbf16>
    %c0_130 = arith.constant 0 : index
    %c0_131 = arith.constant 0 : index
    %160 = vector.load %arg12[%c0_130, %c0_131] : memref<32x32xbf16, #tpu.memory_space<vmem>>, vector<32x32xbf16>
    %cst_132 = arith.constant dense<0.000000e+00> : vector<24x32xf32>
    %161 = tpu.matmul %157, %160, %cst_132 {dimension_numbers = #tpu.dot_dimension_numbers<[1], [0], [0], [1], [0, 0, 1, 1], [], []>} : vector<24x32xbf16>, vector<32x32xbf16>, vector<24x32xf32> -> vector<24x32xf32>
    %c0_133 = arith.constant 0 : index
    %c0_134 = arith.constant 0 : index
    %162 = vector.load %arg24[%c0_133, %c0_134] : memref<24x32xf32, #tpu.memory_space<vmem>>, vector<24x32xf32>
    tpu.vector_store %arg24[%c0_133, %c0_134], %161 {strides = array<i32>} : memref<24x32xf32, #tpu.memory_space<vmem>>, vector<24x32xf32>,
    %c0_135 = arith.constant 0 : index
    %c0_136 = arith.constant 0 : index
    %163 = vector.load %arg14[%c0_135, %c0_136] : memref<32x32xbf16, #tpu.memory_space<vmem>>, vector<32x32xbf16>
    %cst_137 = arith.constant dense<0.000000e+00> : vector<24x32xf32>
    %164 = tpu.matmul %157, %163, %cst_137 {dimension_numbers = #tpu.dot_dimension_numbers<[1], [0], [0], [1], [0, 0, 1, 1], [], []>} : vector<24x32xbf16>, vector<32x32xbf16>, vector<24x32xf32> -> vector<24x32xf32>
    %c0_138 = arith.constant 0 : index
    %c0_139 = arith.constant 0 : index
    %165 = vector.load %arg15[%c0_138, %c0_139] : memref<1x32xf32, #tpu.memory_space<vmem>>, vector<1x32xf32>
    %166 = vector.broadcast %165 : vector<1x32xf32> to vector<24x32xf32>
    %167 = arith.addf %164, %166 : vector<24x32xf32>
    %cst_140 = arith.constant 0.000000e+00 : f32
    %168 = vector.broadcast %cst_140 : f32 to vector<24x32xf32>
    %169 = arith.cmpf oge, %167, %168 : vector<24x32xf32>
    %cst_141 = arith.constant 0.00999999977 : f32
    %170 = vector.broadcast %cst_141 : f32 to vector<24x32xf32>
    %171 = arith.mulf %170, %167 : vector<24x32xf32>
    %172 = arith.select %169, %167, %171 : vector<24x32xi1>, vector<24x32xf32>
    %c0_142 = arith.constant 0 : index
    %c0_143 = arith.constant 0 : index
    %173 = vector.load %arg25[%c0_142, %c0_143] : memref<24x32xf32, #tpu.memory_space<vmem>>, vector<24x32xf32>
    tpu.vector_store %arg25[%c0_142, %c0_143], %172 {strides = array<i32>} : memref<24x32xf32, #tpu.memory_space<vmem>>, vector<24x32xf32>,
    %c0_144 = arith.constant 0 : index
    %c0_145 = arith.constant 0 : index
    %174 = vector.load %arg13[%c0_144, %c0_145] : memref<32x32xbf16, #tpu.memory_space<vmem>>, vector<32x32xbf16>
    %cst_146 = arith.constant dense<0.000000e+00> : vector<24x32xf32>
    %175 = tpu.matmul %159, %174, %cst_146 {dimension_numbers = #tpu.dot_dimension_numbers<[1], [0], [0], [1], [0, 0, 1, 1], [], []>} : vector<24x32xbf16>, vector<32x32xbf16>, vector<24x32xf32> -> vector<24x32xf32>
    %c0_147 = arith.constant 0 : index
    %c0_148 = arith.constant 0 : index
    %176 = vector.load %arg26[%c0_147, %c0_148] : memref<24x32xf32, #tpu.memory_space<vmem>>, vector<24x32xf32>
    tpu.vector_store %arg26[%c0_147, %c0_148], %175 {strides = array<i32>} : memref<24x32xf32, #tpu.memory_space<vmem>>, vector<24x32xf32>,
    %c0_149 = arith.constant 0 : index
    %c0_150 = arith.constant 0 : index
    %177 = vector.load %arg26[%c0_149, %c0_150] : memref<24x32xf32, #tpu.memory_space<vmem>>, vector<8x32xf32>
    %c8_151 = arith.constant 8 : index
    %c0_152 = arith.constant 0 : index
    %178 = vector.load %arg24[%c8_151, %c0_152] : memref<24x32xf32, #tpu.memory_space<vmem>>, vector<8x32xf32>
    %179 = arith.mulf %177, %178 : vector<8x32xf32>
    %cst_153 = arith.constant dense<0.000000e+00> : vector<8xf32>
    %180 = vector.multi_reduction <add>, %179, %cst_153 [1] : vector<8x32xf32> to vector<8xf32>
    %181 = vector.shape_cast %180 : vector<8xf32> to vector<8x1xf32>
    %cst_154 = arith.constant 0.176776692 : f32
    %182 = vector.broadcast %cst_154 : f32 to vector<8x1xf32>
    %183 = arith.mulf %181, %182 : vector<8x1xf32>
    %c16_155 = arith.constant 16 : index
    %c0_156 = arith.constant 0 : index
    %184 = vector.load %arg24[%c16_155, %c0_156] : memref<24x32xf32, #tpu.memory_space<vmem>>, vector<8x32xf32>
    %185 = arith.mulf %177, %184 : vector<8x32xf32>
    %cst_157 = arith.constant dense<0.000000e+00> : vector<8xf32>
    %186 = vector.multi_reduction <add>, %185, %cst_157 [1] : vector<8x32xf32> to vector<8xf32>
    %187 = vector.shape_cast %186 : vector<8xf32> to vector<8x1xf32>
    %cst_158 = arith.constant 0.176776692 : f32
    %188 = vector.broadcast %cst_158 : f32 to vector<8x1xf32>
    %189 = arith.mulf %187, %188 : vector<8x1xf32>
    %190 = arith.maximumf %183, %189 : vector<8x1xf32>
    %191 = arith.subf %183, %190 : vector<8x1xf32>
    %192 = math.exp %191 : vector<8x1xf32>
    %193 = arith.subf %189, %190 : vector<8x1xf32>
    %194 = math.exp %193 : vector<8x1xf32>
    %195 = arith.addf %192, %194 : vector<8x1xf32>
    %196 = tpu.reciprocal %195 {approx = true} : vector<8x1xf32> -> vector<8x1xf32>
    %197 = arith.mulf %192, %196 : vector<8x1xf32>
    %c8_159 = arith.constant 8 : index
    %c0_160 = arith.constant 0 : index
    %198 = vector.load %arg25[%c8_159, %c0_160] : memref<24x32xf32, #tpu.memory_space<vmem>>, vector<8x32xf32>
    %199 = vector.broadcast %197 : vector<8x1xf32> to vector<8x32xf32>
    %200 = arith.mulf %199, %198 : vector<8x32xf32>
    %201 = arith.mulf %194, %196 : vector<8x1xf32>
    %c16_161 = arith.constant 16 : index
    %c0_162 = arith.constant 0 : index
    %202 = vector.load %arg25[%c16_161, %c0_162] : memref<24x32xf32, #tpu.memory_space<vmem>>, vector<8x32xf32>
    %203 = vector.broadcast %201 : vector<8x1xf32> to vector<8x32xf32>
    %204 = arith.mulf %203, %202 : vector<8x32xf32>
    %205 = arith.addf %200, %204 : vector<8x32xf32>
    %c0_163 = arith.constant 0 : index
    %c0_164 = arith.constant 0 : index
    %206 = vector.load %arg23[%c0_163, %c0_164] : memref<24x32xf32, #tpu.memory_space<vmem>>, vector<8x32xf32>
    %207 = arith.truncf %206 : vector<8x32xf32> to vector<8x32xbf16>
    %c0_165 = arith.constant 0 : index
    %c0_166 = arith.constant 0 : index
    %c0_167 = arith.constant 0 : index
    %208 = vector.load %arg16[%c0_165, %c0_166, %c0_167] : memref<3x32x32xbf16, #tpu.memory_space<vmem>>, vector<1x32x32xbf16>
    %209 = vector.shape_cast %208 : vector<1x32x32xbf16> to vector<32x32xbf16>
    %cst_168 = arith.constant dense<0.000000e+00> : vector<8x32xf32>
    %210 = tpu.matmul %207, %209, %cst_168 {dimension_numbers = #tpu.dot_dimension_numbers<[1], [0], [0], [1], [0, 0, 1, 1], [], []>} : vector<8x32xbf16>, vector<32x32xbf16>, vector<8x32xf32> -> vector<8x32xf32>
    %211 = arith.truncf %205 : vector<8x32xf32> to vector<8x32xbf16>
    %c0_169 = arith.constant 0 : index
    %c0_170 = arith.constant 0 : index
    %c0_171 = arith.constant 0 : index
    %212 = vector.load %arg17[%c0_169, %c0_170, %c0_171] : memref<3x32x32xbf16, #tpu.memory_space<vmem>>, vector<1x32x32xbf16>
    %213 = vector.shape_cast %212 : vector<1x32x32xbf16> to vector<32x32xbf16>
    %cst_172 = arith.constant dense<0.000000e+00> : vector<8x32xf32>
    %214 = tpu.matmul %211, %213, %cst_172 {dimension_numbers = #tpu.dot_dimension_numbers<[1], [0], [0], [1], [0, 0, 1, 1], [], []>} : vector<8x32xbf16>, vector<32x32xbf16>, vector<8x32xf32> -> vector<8x32xf32>
    %215 = arith.addf %210, %214 : vector<8x32xf32>
    %c0_173 = arith.constant 0 : index
    %c0_174 = arith.constant 0 : index
    %c0_175 = arith.constant 0 : index
    %216 = vector.load %arg18[%c0_173, %c0_174, %c0_175] : memref<3x1x32xf32, #tpu.memory_space<vmem>>, vector<1x1x32xf32>
    %217 = vector.shape_cast %216 : vector<1x1x32xf32> to vector<1x32xf32>
    %218 = vector.broadcast %217 : vector<1x32xf32> to vector<8x32xf32>
    %219 = arith.addf %215, %218 : vector<8x32xf32>
    %cst_176 = arith.constant 0.000000e+00 : f32
    %220 = vector.broadcast %cst_176 : f32 to vector<8x32xf32>
    %221 = arith.cmpf oge, %219, %220 : vector<8x32xf32>
    %cst_177 = arith.constant 0.00999999977 : f32
    %222 = vector.broadcast %cst_177 : f32 to vector<8x32xf32>
    %223 = arith.mulf %222, %219 : vector<8x32xf32>
    %224 = arith.select %221, %219, %223 : vector<8x32xi1>, vector<8x32xf32>
    %225 = arith.truncf %224 : vector<8x32xf32> to vector<8x32xbf16>
    %c0_178 = arith.constant 0 : index
    %c0_179 = arith.constant 0 : index
    %c0_180 = arith.constant 0 : index
    %226 = vector.load %arg19[%c0_178, %c0_179, %c0_180] : memref<3x32x5xbf16, #tpu.memory_space<vmem>>, vector<1x32x5xbf16>
    %227 = vector.shape_cast %226 : vector<1x32x5xbf16> to vector<32x5xbf16>
    %cst_181 = arith.constant dense<0.000000e+00> : vector<8x5xf32>
    %228 = tpu.matmul %225, %227, %cst_181 {dimension_numbers = #tpu.dot_dimension_numbers<[1], [0], [0], [1], [0, 0, 1, 1], [], []>} : vector<8x32xbf16>, vector<32x5xbf16>, vector<8x5xf32> -> vector<8x5xf32>
    %c0_182 = arith.constant 0 : index
    %c0_183 = arith.constant 0 : index
    %c0_184 = arith.constant 0 : index
    %229 = vector.load %arg20[%c0_182, %c0_183, %c0_184] : memref<3x1x5xf32, #tpu.memory_space<vmem>>, vector<1x1x5xf32>
    %230 = vector.shape_cast %229 : vector<1x1x5xf32> to vector<1x5xf32>
    %231 = vector.broadcast %230 : vector<1x5xf32> to vector<8x5xf32>
    %232 = arith.addf %228, %231 : vector<8x5xf32>
    %c0_185 = arith.constant 0 : index
    %c0_186 = arith.constant 0 : index
    %c0_187 = arith.constant 0 : index
    %233 = vector.load %arg21[%c0_185, %c0_186, %c0_187] : memref<3x8x5xf32, #tpu.memory_space<vmem>>, vector<1x8x5xf32>
    %234 = vector.shape_cast %233 : vector<1x8x5xf32> to vector<8x5xf32>
    %235 = vector.shape_cast %232 : vector<8x5xf32> to vector<1x8x5xf32>
    tpu.vector_store %arg21[%c0_185, %c0_186, %c0_187], %235 {strides = array<i32>} : memref<3x8x5xf32, #tpu.memory_space<vmem>>, vector<1x8x5xf32>,
    %c8_188 = arith.constant 8 : index
    %c0_189 = arith.constant 0 : index
    %236 = vector.load %arg26[%c8_188, %c0_189] : memref<24x32xf32, #tpu.memory_space<vmem>>, vector<8x32xf32>
    %c0_190 = arith.constant 0 : index
    %c0_191 = arith.constant 0 : index
    %237 = vector.load %arg24[%c0_190, %c0_191] : memref<24x32xf32, #tpu.memory_space<vmem>>, vector<8x32xf32>
    %238 = arith.mulf %236, %237 : vector<8x32xf32>
    %cst_192 = arith.constant dense<0.000000e+00> : vector<8xf32>
    %239 = vector.multi_reduction <add>, %238, %cst_192 [1] : vector<8x32xf32> to vector<8xf32>
    %240 = vector.shape_cast %239 : vector<8xf32> to vector<8x1xf32>
    %cst_193 = arith.constant 0.176776692 : f32
    %241 = vector.broadcast %cst_193 : f32 to vector<8x1xf32>
    %242 = arith.mulf %240, %241 : vector<8x1xf32>
    %c16_194 = arith.constant 16 : index
    %c0_195 = arith.constant 0 : index
    %243 = vector.load %arg24[%c16_194, %c0_195] : memref<24x32xf32, #tpu.memory_space<vmem>>, vector<8x32xf32>
    %244 = arith.mulf %236, %243 : vector<8x32xf32>
    %cst_196 = arith.constant dense<0.000000e+00> : vector<8xf32>
    %245 = vector.multi_reduction <add>, %244, %cst_196 [1] : vector<8x32xf32> to vector<8xf32>
    %246 = vector.shape_cast %245 : vector<8xf32> to vector<8x1xf32>
    %cst_197 = arith.constant 0.176776692 : f32
    %247 = vector.broadcast %cst_197 : f32 to vector<8x1xf32>
    %248 = arith.mulf %246, %247 : vector<8x1xf32>
    %249 = arith.maximumf %242, %248 : vector<8x1xf32>
    %250 = arith.subf %242, %249 : vector<8x1xf32>
    %251 = math.exp %250 : vector<8x1xf32>
    %252 = arith.subf %248, %249 : vector<8x1xf32>
    %253 = math.exp %252 : vector<8x1xf32>
    %254 = arith.addf %251, %253 : vector<8x1xf32>
    %255 = tpu.reciprocal %254 {approx = true} : vector<8x1xf32> -> vector<8x1xf32>
    %256 = arith.mulf %251, %255 : vector<8x1xf32>
    %c0_198 = arith.constant 0 : index
    %c0_199 = arith.constant 0 : index
    %257 = vector.load %arg25[%c0_198, %c0_199] : memref<24x32xf32, #tpu.memory_space<vmem>>, vector<8x32xf32>
    %258 = vector.broadcast %256 : vector<8x1xf32> to vector<8x32xf32>
    %259 = arith.mulf %258, %257 : vector<8x32xf32>
    %260 = arith.mulf %253, %255 : vector<8x1xf32>
    %c16_200 = arith.constant 16 : index
    %c0_201 = arith.constant 0 : index
    %261 = vector.load %arg25[%c16_200, %c0_201] : memref<24x32xf32, #tpu.memory_space<vmem>>, vector<8x32xf32>
    %262 = vector.broadcast %260 : vector<8x1xf32> to vector<8x32xf32>
    %263 = arith.mulf %262, %261 : vector<8x32xf32>
    %264 = arith.addf %259, %263 : vector<8x32xf32>
    %c8_202 = arith.constant 8 : index
    %c0_203 = arith.constant 0 : index
    %265 = vector.load %arg23[%c8_202, %c0_203] : memref<24x32xf32, #tpu.memory_space<vmem>>, vector<8x32xf32>
    %266 = arith.truncf %265 : vector<8x32xf32> to vector<8x32xbf16>
    %c1_204 = arith.constant 1 : index
    %c0_205 = arith.constant 0 : index
    %c0_206 = arith.constant 0 : index
    %267 = vector.load %arg16[%c1_204, %c0_205, %c0_206] : memref<3x32x32xbf16, #tpu.memory_space<vmem>>, vector<1x32x32xbf16>
    %268 = vector.shape_cast %267 : vector<1x32x32xbf16> to vector<32x32xbf16>
    %cst_207 = arith.constant dense<0.000000e+00> : vector<8x32xf32>
    %269 = tpu.matmul %266, %268, %cst_207 {dimension_numbers = #tpu.dot_dimension_numbers<[1], [0], [0], [1], [0, 0, 1, 1], [], []>} : vector<8x32xbf16>, vector<32x32xbf16>, vector<8x32xf32> -> vector<8x32xf32>
    %270 = arith.truncf %264 : vector<8x32xf32> to vector<8x32xbf16>
    %c1_208 = arith.constant 1 : index
    %c0_209 = arith.constant 0 : index
    %c0_210 = arith.constant 0 : index
    %271 = vector.load %arg17[%c1_208, %c0_209, %c0_210] : memref<3x32x32xbf16, #tpu.memory_space<vmem>>, vector<1x32x32xbf16>
    %272 = vector.shape_cast %271 : vector<1x32x32xbf16> to vector<32x32xbf16>
    %cst_211 = arith.constant dense<0.000000e+00> : vector<8x32xf32>
    %273 = tpu.matmul %270, %272, %cst_211 {dimension_numbers = #tpu.dot_dimension_numbers<[1], [0], [0], [1], [0, 0, 1, 1], [], []>} : vector<8x32xbf16>, vector<32x32xbf16>, vector<8x32xf32> -> vector<8x32xf32>
    %274 = arith.addf %269, %273 : vector<8x32xf32>
    %c1_212 = arith.constant 1 : index
    %c0_213 = arith.constant 0 : index
    %c0_214 = arith.constant 0 : index
    %275 = vector.load %arg18[%c1_212, %c0_213, %c0_214] : memref<3x1x32xf32, #tpu.memory_space<vmem>>, vector<1x1x32xf32>
    %276 = vector.shape_cast %275 : vector<1x1x32xf32> to vector<1x32xf32>
    %277 = vector.broadcast %276 : vector<1x32xf32> to vector<8x32xf32>
    %278 = arith.addf %274, %277 : vector<8x32xf32>
    %cst_215 = arith.constant 0.000000e+00 : f32
    %279 = vector.broadcast %cst_215 : f32 to vector<8x32xf32>
    %280 = arith.cmpf oge, %278, %279 : vector<8x32xf32>
    %cst_216 = arith.constant 0.00999999977 : f32
    %281 = vector.broadcast %cst_216 : f32 to vector<8x32xf32>
    %282 = arith.mulf %281, %278 : vector<8x32xf32>
    %283 = arith.select %280, %278, %282 : vector<8x32xi1>, vector<8x32xf32>
    %284 = arith.truncf %283 : vector<8x32xf32> to vector<8x32xbf16>
    %c1_217 = arith.constant 1 : index
    %c0_218 = arith.constant 0 : index
    %c0_219 = arith.constant 0 : index
    %285 = vector.load %arg19[%c1_217, %c0_218, %c0_219] : memref<3x32x5xbf16, #tpu.memory_space<vmem>>, vector<1x32x5xbf16>
    %286 = vector.shape_cast %285 : vector<1x32x5xbf16> to vector<32x5xbf16>
    %cst_220 = arith.constant dense<0.000000e+00> : vector<8x5xf32>
    %287 = tpu.matmul %284, %286, %cst_220 {dimension_numbers = #tpu.dot_dimension_numbers<[1], [0], [0], [1], [0, 0, 1, 1], [], []>} : vector<8x32xbf16>, vector<32x5xbf16>, vector<8x5xf32> -> vector<8x5xf32>
    %c1_221 = arith.constant 1 : index
    %c0_222 = arith.constant 0 : index
    %c0_223 = arith.constant 0 : index
    %288 = vector.load %arg20[%c1_221, %c0_222, %c0_223] : memref<3x1x5xf32, #tpu.memory_space<vmem>>, vector<1x1x5xf32>
    %289 = vector.shape_cast %288 : vector<1x1x5xf32> to vector<1x5xf32>
    %290 = vector.broadcast %289 : vector<1x5xf32> to vector<8x5xf32>
    %291 = arith.addf %287, %290 : vector<8x5xf32>
    %c1_224 = arith.constant 1 : index
    %c0_225 = arith.constant 0 : index
    %c0_226 = arith.constant 0 : index
    %292 = vector.load %arg21[%c1_224, %c0_225, %c0_226] : memref<3x8x5xf32, #tpu.memory_space<vmem>>, vector<1x8x5xf32>
    %293 = vector.shape_cast %292 : vector<1x8x5xf32> to vector<8x5xf32>
    %294 = vector.shape_cast %291 : vector<8x5xf32> to vector<1x8x5xf32>
    tpu.vector_store %arg21[%c1_224, %c0_225, %c0_226], %294 {strides = array<i32>} : memref<3x8x5xf32, #tpu.memory_space<vmem>>, vector<1x8x5xf32>,
    %c16_227 = arith.constant 16 : index
    %c0_228 = arith.constant 0 : index
    %295 = vector.load %arg26[%c16_227, %c0_228] : memref<24x32xf32, #tpu.memory_space<vmem>>, vector<8x32xf32>
    %c0_229 = arith.constant 0 : index
    %c0_230 = arith.constant 0 : index
    %296 = vector.load %arg24[%c0_229, %c0_230] : memref<24x32xf32, #tpu.memory_space<vmem>>, vector<8x32xf32>
    %297 = arith.mulf %295, %296 : vector<8x32xf32>
    %cst_231 = arith.constant dense<0.000000e+00> : vector<8xf32>
    %298 = vector.multi_reduction <add>, %297, %cst_231 [1] : vector<8x32xf32> to vector<8xf32>
    %299 = vector.shape_cast %298 : vector<8xf32> to vector<8x1xf32>
    %cst_232 = arith.constant 0.176776692 : f32
    %300 = vector.broadcast %cst_232 : f32 to vector<8x1xf32>
    %301 = arith.mulf %299, %300 : vector<8x1xf32>
    %c8_233 = arith.constant 8 : index
    %c0_234 = arith.constant 0 : index
    %302 = vector.load %arg24[%c8_233, %c0_234] : memref<24x32xf32, #tpu.memory_space<vmem>>, vector<8x32xf32>
    %303 = arith.mulf %295, %302 : vector<8x32xf32>
    %cst_235 = arith.constant dense<0.000000e+00> : vector<8xf32>
    %304 = vector.multi_reduction <add>, %303, %cst_235 [1] : vector<8x32xf32> to vector<8xf32>
    %305 = vector.shape_cast %304 : vector<8xf32> to vector<8x1xf32>
    %cst_236 = arith.constant 0.176776692 : f32
    %306 = vector.broadcast %cst_236 : f32 to vector<8x1xf32>
    %307 = arith.mulf %305, %306 : vector<8x1xf32>
    %308 = arith.maximumf %301, %307 : vector<8x1xf32>
    %309 = arith.subf %301, %308 : vector<8x1xf32>
    %310 = math.exp %309 : vector<8x1xf32>
    %311 = arith.subf %307, %308 : vector<8x1xf32>
    %312 = math.exp %311 : vector<8x1xf32>
    %313 = arith.addf %310, %312 : vector<8x1xf32>
    %314 = tpu.reciprocal %313 {approx = true} : vector<8x1xf32> -> vector<8x1xf32>
    %315 = arith.mulf %310, %314 : vector<8x1xf32>
    %c0_237 = arith.constant 0 : index
    %c0_238 = arith.constant 0 : index
    %316 = vector.load %arg25[%c0_237, %c0_238] : memref<24x32xf32, #tpu.memory_space<vmem>>, vector<8x32xf32>
    %317 = vector.broadcast %315 : vector<8x1xf32> to vector<8x32xf32>
    %318 = arith.mulf %317, %316 : vector<8x32xf32>
    %319 = arith.mulf %312, %314 : vector<8x1xf32>
    %c8_239 = arith.constant 8 : index
    %c0_240 = arith.constant 0 : index
    %320 = vector.load %arg25[%c8_239, %c0_240] : memref<24x32xf32, #tpu.memory_space<vmem>>, vector<8x32xf32>
    %321 = vector.broadcast %319 : vector<8x1xf32> to vector<8x32xf32>
    %322 = arith.mulf %321, %320 : vector<8x32xf32>
    %323 = arith.addf %318, %322 : vector<8x32xf32>
    %c16_241 = arith.constant 16 : index
    %c0_242 = arith.constant 0 : index
    %324 = vector.load %arg23[%c16_241, %c0_242] : memref<24x32xf32, #tpu.memory_space<vmem>>, vector<8x32xf32>
    %325 = arith.truncf %324 : vector<8x32xf32> to vector<8x32xbf16>
    %c2_243 = arith.constant 2 : index
    %c0_244 = arith.constant 0 : index
    %c0_245 = arith.constant 0 : index
    %326 = vector.load %arg16[%c2_243, %c0_244, %c0_245] : memref<3x32x32xbf16, #tpu.memory_space<vmem>>, vector<1x32x32xbf16>
    %327 = vector.shape_cast %326 : vector<1x32x32xbf16> to vector<32x32xbf16>
    %cst_246 = arith.constant dense<0.000000e+00> : vector<8x32xf32>
    %328 = tpu.matmul %325, %327, %cst_246 {dimension_numbers = #tpu.dot_dimension_numbers<[1], [0], [0], [1], [0, 0, 1, 1], [], []>} : vector<8x32xbf16>, vector<32x32xbf16>, vector<8x32xf32> -> vector<8x32xf32>
    %329 = arith.truncf %323 : vector<8x32xf32> to vector<8x32xbf16>
    %c2_247 = arith.constant 2 : index
    %c0_248 = arith.constant 0 : index
    %c0_249 = arith.constant 0 : index
    %330 = vector.load %arg17[%c2_247, %c0_248, %c0_249] : memref<3x32x32xbf16, #tpu.memory_space<vmem>>, vector<1x32x32xbf16>
    %331 = vector.shape_cast %330 : vector<1x32x32xbf16> to vector<32x32xbf16>
    %cst_250 = arith.constant dense<0.000000e+00> : vector<8x32xf32>
    %332 = tpu.matmul %329, %331, %cst_250 {dimension_numbers = #tpu.dot_dimension_numbers<[1], [0], [0], [1], [0, 0, 1, 1], [], []>} : vector<8x32xbf16>, vector<32x32xbf16>, vector<8x32xf32> -> vector<8x32xf32>
    %333 = arith.addf %328, %332 : vector<8x32xf32>
    %c2_251 = arith.constant 2 : index
    %c0_252 = arith.constant 0 : index
    %c0_253 = arith.constant 0 : index
    %334 = vector.load %arg18[%c2_251, %c0_252, %c0_253] : memref<3x1x32xf32, #tpu.memory_space<vmem>>, vector<1x1x32xf32>
    %335 = vector.shape_cast %334 : vector<1x1x32xf32> to vector<1x32xf32>
    %336 = vector.broadcast %335 : vector<1x32xf32> to vector<8x32xf32>
    %337 = arith.addf %333, %336 : vector<8x32xf32>
    %cst_254 = arith.constant 0.000000e+00 : f32
    %338 = vector.broadcast %cst_254 : f32 to vector<8x32xf32>
    %339 = arith.cmpf oge, %337, %338 : vector<8x32xf32>
    %cst_255 = arith.constant 0.00999999977 : f32
    %340 = vector.broadcast %cst_255 : f32 to vector<8x32xf32>
    %341 = arith.mulf %340, %337 : vector<8x32xf32>
    %342 = arith.select %339, %337, %341 : vector<8x32xi1>, vector<8x32xf32>
    %343 = arith.truncf %342 : vector<8x32xf32> to vector<8x32xbf16>
    %c2_256 = arith.constant 2 : index
    %c0_257 = arith.constant 0 : index
    %c0_258 = arith.constant 0 : index
    %344 = vector.load %arg19[%c2_256, %c0_257, %c0_258] : memref<3x32x5xbf16, #tpu.memory_space<vmem>>, vector<1x32x5xbf16>
    %345 = vector.shape_cast %344 : vector<1x32x5xbf16> to vector<32x5xbf16>
    %cst_259 = arith.constant dense<0.000000e+00> : vector<8x5xf32>
    %346 = tpu.matmul %343, %345, %cst_259 {dimension_numbers = #tpu.dot_dimension_numbers<[1], [0], [0], [1], [0, 0, 1, 1], [], []>} : vector<8x32xbf16>, vector<32x5xbf16>, vector<8x5xf32> -> vector<8x5xf32>
    %c2_260 = arith.constant 2 : index
    %c0_261 = arith.constant 0 : index
    %c0_262 = arith.constant 0 : index
    %347 = vector.load %arg20[%c2_260, %c0_261, %c0_262] : memref<3x1x5xf32, #tpu.memory_space<vmem>>, vector<1x1x5xf32>
    %348 = vector.shape_cast %347 : vector<1x1x5xf32> to vector<1x5xf32>
    %349 = vector.broadcast %348 : vector<1x5xf32> to vector<8x5xf32>
    %350 = arith.addf %346, %349 : vector<8x5xf32>
    %c2_263 = arith.constant 2 : index
    %c0_264 = arith.constant 0 : index
    %c0_265 = arith.constant 0 : index
    %351 = vector.load %arg21[%c2_263, %c0_264, %c0_265] : memref<3x8x5xf32, #tpu.memory_space<vmem>>, vector<1x8x5xf32>
    %352 = vector.shape_cast %351 : vector<1x8x5xf32> to vector<8x5xf32>
    %353 = vector.shape_cast %350 : vector<8x5xf32> to vector<1x8x5xf32>
    tpu.vector_store %arg21[%c2_263, %c0_264, %c0_265], %353 {strides = array<i32>} : memref<3x8x5xf32, #tpu.memory_space<vmem>>, vector<1x8x5xf32>,
    return
  }
  func.func @transform_0(%arg0: i32) -> (i32, i32, i32) {
    %c0_i32 = arith.constant 0 : i32
    %c0_i32_0 = arith.constant 0 : i32
    %c0_i32_1 = arith.constant 0 : i32
    return %c0_i32, %arg0, %c0_i32_0 : i32, i32, i32
  }
  func.func @transform_1(%arg0: i32) -> (i32, i32, i32) {
    %c0_i32 = arith.constant 0 : i32
    %c0_i32_0 = arith.constant 0 : i32
    %c0_i32_1 = arith.constant 0 : i32
    return %c0_i32, %arg0, %c0_i32_0 : i32, i32, i32
  }
  func.func @transform_2(%arg0: i32) -> (i32, i32, i32) {
    %c0_i32 = arith.constant 0 : i32
    %c0_i32_0 = arith.constant 0 : i32
    %c0_i32_1 = arith.constant 0 : i32
    %c0_i32_2 = arith.constant 0 : i32
    return %c0_i32, %c0_i32_0, %c0_i32_1 : i32, i32, i32
  }
  func.func @transform_3(%arg0: i32) -> (i32, i32, i32) {
    %c0_i32 = arith.constant 0 : i32
    %c0_i32_0 = arith.constant 0 : i32
    %c0_i32_1 = arith.constant 0 : i32
    %c0_i32_2 = arith.constant 0 : i32
    return %c0_i32, %c0_i32_0, %c0_i32_1 : i32, i32, i32
  }
  func.func @transform_4(%arg0: i32) -> (i32, i32, i32) {
    %c0_i32 = arith.constant 0 : i32
    %c0_i32_0 = arith.constant 0 : i32
    %c0_i32_1 = arith.constant 0 : i32
    %c0_i32_2 = arith.constant 0 : i32
    return %c0_i32, %c0_i32_0, %c0_i32_1 : i32, i32, i32
  }
  func.func @transform_5(%arg0: i32) -> (i32, i32, i32) {
    %c0_i32 = arith.constant 0 : i32
    %c0_i32_0 = arith.constant 0 : i32
    %c0_i32_1 = arith.constant 0 : i32
    %c0_i32_2 = arith.constant 0 : i32
    return %c0_i32, %c0_i32_0, %c0_i32_1 : i32, i32, i32
  }
  func.func @transform_6(%arg0: i32) -> (i32, i32, i32) {
    %c0_i32 = arith.constant 0 : i32
    %c0_i32_0 = arith.constant 0 : i32
    %c0_i32_1 = arith.constant 0 : i32
    %c0_i32_2 = arith.constant 0 : i32
    return %c0_i32, %c0_i32_0, %c0_i32_1 : i32, i32, i32
  }
  func.func @transform_7(%arg0: i32) -> (i32, i32, i32) {
    %c0_i32 = arith.constant 0 : i32
    %c0_i32_0 = arith.constant 0 : i32
    %c0_i32_1 = arith.constant 0 : i32
    %c0_i32_2 = arith.constant 0 : i32
    return %c0_i32, %c0_i32_0, %c0_i32_1 : i32, i32, i32
  }
  func.func @transform_8(%arg0: i32) -> (i32, i32, i32) {
    %c0_i32 = arith.constant 0 : i32
    %c0_i32_0 = arith.constant 0 : i32
    %c0_i32_1 = arith.constant 0 : i32
    %c0_i32_2 = arith.constant 0 : i32
    return %c0_i32, %c0_i32_0, %c0_i32_1 : i32, i32, i32
  }
  func.func @transform_9(%arg0: i32) -> (i32, i32, i32) {
    %c0_i32 = arith.constant 0 : i32
    %c0_i32_0 = arith.constant 0 : i32
    %c0_i32_1 = arith.constant 0 : i32
    %c0_i32_2 = arith.constant 0 : i32
    return %c0_i32, %c0_i32_0, %c0_i32_1 : i32, i32, i32
  }
  func.func @transform_10(%arg0: i32) -> (i32, i32, i32) {
    %c0_i32 = arith.constant 0 : i32
    %c0_i32_0 = arith.constant 0 : i32
    %c0_i32_1 = arith.constant 0 : i32
    %c0_i32_2 = arith.constant 0 : i32
    return %c0_i32, %c0_i32_0, %c0_i32_1 : i32, i32, i32
  }
  func.func @transform_11(%arg0: i32) -> (i32, i32) {
    %c0_i32 = arith.constant 0 : i32
    %c0_i32_0 = arith.constant 0 : i32
    %c0_i32_1 = arith.constant 0 : i32
    return %c0_i32, %c0_i32_0 : i32, i32
  }
  func.func @transform_12(%arg0: i32) -> (i32, i32) {
    %c0_i32 = arith.constant 0 : i32
    %c0_i32_0 = arith.constant 0 : i32
    %c0_i32_1 = arith.constant 0 : i32
    return %c0_i32, %c0_i32_0 : i32, i32
  }
  func.func @transform_13(%arg0: i32) -> (i32, i32) {
    %c0_i32 = arith.constant 0 : i32
    %c0_i32_0 = arith.constant 0 : i32
    %c0_i32_1 = arith.constant 0 : i32
    return %c0_i32, %c0_i32_0 : i32, i32
  }
  func.func @transform_14(%arg0: i32) -> (i32, i32) {
    %c0_i32 = arith.constant 0 : i32
    %c0_i32_0 = arith.constant 0 : i32
    %c0_i32_1 = arith.constant 0 : i32
    return %c0_i32, %c0_i32_0 : i32, i32
  }
  func.func @transform_15(%arg0: i32) -> (i32, i32, i32) {
    %c0_i32 = arith.constant 0 : i32
    %c0_i32_0 = arith.constant 0 : i32
    %c0_i32_1 = arith.constant 0 : i32
    %c0_i32_2 = arith.constant 0 : i32
    return %c0_i32, %c0_i32_0, %c0_i32_1 : i32, i32, i32
  }
  func.func @transform_16(%arg0: i32) -> (i32, i32, i32) {
    %c0_i32 = arith.constant 0 : i32
    %c0_i32_0 = arith.constant 0 : i32
    %c0_i32_1 = arith.constant 0 : i32
    %c0_i32_2 = arith.constant 0 : i32
    return %c0_i32, %c0_i32_0, %c0_i32_1 : i32, i32, i32
  }
  func.func @transform_17(%arg0: i32) -> (i32, i32, i32) {
    %c0_i32 = arith.constant 0 : i32
    %c0_i32_0 = arith.constant 0 : i32
    %c0_i32_1 = arith.constant 0 : i32
    %c0_i32_2 = arith.constant 0 : i32
    return %c0_i32, %c0_i32_0, %c0_i32_1 : i32, i32, i32
  }
  func.func @transform_18(%arg0: i32) -> (i32, i32, i32) {
    %c0_i32 = arith.constant 0 : i32
    %c0_i32_0 = arith.constant 0 : i32
    %c0_i32_1 = arith.constant 0 : i32
    %c0_i32_2 = arith.constant 0 : i32
    return %c0_i32, %c0_i32_0, %c0_i32_1 : i32, i32, i32
  }
  func.func @transform_19(%arg0: i32) -> (i32, i32, i32) {
    %c0_i32 = arith.constant 0 : i32
    %c0_i32_0 = arith.constant 0 : i32
    %c0_i32_1 = arith.constant 0 : i32
    %c0_i32_2 = arith.constant 0 : i32
    return %c0_i32, %c0_i32_0, %c0_i32_1 : i32, i32, i32
  }
  func.func @transform_20(%arg0: i32) -> (i32, i32, i32) {
    %c0_i32 = arith.constant 0 : i32
    %c0_i32_0 = arith.constant 0 : i32
    %c0_i32_1 = arith.constant 0 : i32
    return %c0_i32, %arg0, %c0_i32_0 : i32, i32, i32
  }
}

</mosaic_0001>

<llo_original>
// kernel: tpu_custom_call.1
$region0: #{tpu_custom_call.1}
  #allocation0 [shape = 'u32[]', space=smem, size = 0x4, offset = 0x4, fixed_abs, tag = 'smem constant byte address 0x4 - core index']
  #allocation1 [shape = 'u32[72,128]{1,0:T(1,128)}', space=vmem, size = 0x9000, scoped, tag = 'internal scratch']
  #allocation2 [shape = 'f32[24,32]{1,0:T(8,128)}', space=vmem, size = 0x3000, scoped, tag = 'scratch operand']
  #allocation3 [shape = 'f32[24,32]{1,0:T(8,128)}', space=vmem, size = 0x3000, scoped, tag = 'scratch operand']
  #allocation4 [shape = 'f32[24,32]{1,0:T(8,128)}', space=vmem, size = 0x3000, scoped, tag = 'scratch operand']
  #allocation5 [shape = 'f32[24,32]{1,0:T(8,128)}', space=vmem, size = 0x3000, scoped, tag = 'scratch operand']
  #allocation6 [shape = 'f32[24,32]{1,0:T(8,128)}', space=vmem, size = 0x3000, scoped, tag = 'scratch operand']
  %s0 = inlined_call_operand.vmem [shape: f32[3,16,10], index: 0, kind: input, shape index: {}]
  %s1 = inlined_call_operand.vmem [shape: f32[3,16,5], index: 1, kind: input, shape index: {}]
  %s2 = inlined_call_operand.vmem [shape: f32[3,1,10], index: 2, kind: input, shape index: {}]
  %s3 = inlined_call_operand.vmem [shape: f32[3,1,10], index: 3, kind: input, shape index: {}]
  %s4 = inlined_call_operand.vmem [shape: f32[3,1,5], index: 4, kind: input, shape index: {}]
  %s5 = inlined_call_operand.vmem [shape: f32[3,1,5], index: 5, kind: input, shape index: {}]
  %s6 = inlined_call_operand.vmem [shape: bf16[3,10,32], index: 6, kind: input, shape index: {}]
  %s7 = inlined_call_operand.vmem [shape: bf16[3,5,32], index: 7, kind: input, shape index: {}]
  %s8 = inlined_call_operand.vmem [shape: f32[3,1,32], index: 8, kind: input, shape index: {}]
  %s9 = inlined_call_operand.vmem [shape: bf16[3,10,32], index: 9, kind: input, shape index: {}]
  %s10 = inlined_call_operand.vmem [shape: f32[3,1,32], index: 10, kind: input, shape index: {}]
  %s11 = inlined_call_operand.vmem [shape: bf16[32,32], index: 11, kind: input, shape index: {}]
  %s12 = inlined_call_operand.vmem [shape: bf16[32,32], index: 12, kind: input, shape index: {}]
  %s13 = inlined_call_operand.vmem [shape: bf16[32,32], index: 13, kind: input, shape index: {}]
  %s14 = inlined_call_operand.vmem [shape: f32[1,32], index: 14, kind: input, shape index: {}]
  %s15 = inlined_call_operand.vmem [shape: bf16[3,32,32], index: 15, kind: input, shape index: {}]
  %s16 = inlined_call_operand.vmem [shape: bf16[3,32,32], index: 16, kind: input, shape index: {}]
  %s17 = inlined_call_operand.vmem [shape: f32[3,1,32], index: 17, kind: input, shape index: {}]
  %s18 = inlined_call_operand.vmem [shape: bf16[3,32,5], index: 18, kind: input, shape index: {}]
  %s19 = inlined_call_operand.vmem [shape: f32[3,1,5], index: 19, kind: input, shape index: {}]
  %s20 = inlined_call_operand.vmem [shape: f32[3,16,5], index: 20, kind: output, shape index: {}]
  %s21 = sld [smem:[#allocation0]]
  $region223: #{tpu_custom_call.1} parent=0
    _
  %s23 = ssub.s32 1, %s21
  %s24 = scalar_select 0, %s23, %s21
  $region1: #{tpu_custom_call.1} parent=0
    #allocation7 [shape = 'u8[24576]{0}', space=vmem, size = 0x6000, scoped, tag = 'input window, operand 0']
    #allocation8 [shape = 'u8[24576]{0}', space=vmem, size = 0x6000, scoped, tag = 'input window, operand 1']
    #allocation9 [shape = 'u8[24576]{0}', space=vmem, size = 0x6000, scoped, tag = 'output window, operand 0']
    loop: start=0, step=1, limit=4
    $region2: #{tpu_custom_call.1} parent=1 // loop_pre_header
      _
    $region3: #{tpu_custom_call.1} parent=1 // loop_header
      %s26 = sphi 0, %s30
      %p27 = scmp.ge.s32.totalorder %s26, 4
      %s36 = sphi 0, %s38
      %s39 = sphi 0, %s36
      %s40 = sphi 0, %s39
      %s56 = sphi 0, %s40
      %s62 = sphi 0, %s64
      %s65 = sphi 0, %s62
      %s66 = sphi 0, %s65
      %s82 = sphi 0, %s66
      %s86 = sphi 0, %s86
      %s88 = sphi 0, %s86
      %s89 = sphi 0, %s88
      %s103 = sphi 0, %s89
      %s107 = sphi 0, %s107
      %s109 = sphi 0, %s107
      %s110 = sphi 0, %s109
      %s124 = sphi 0, %s110
      %s128 = sphi 0, %s128
      %s130 = sphi 0, %s128
      %s131 = sphi 0, %s130
      %s145 = sphi 0, %s131
      %s149 = sphi 0, %s149
      %s151 = sphi 0, %s149
      %s152 = sphi 0, %s151
      %s166 = sphi 0, %s152
      %s170 = sphi 0, %s170
      %s172 = sphi 0, %s170
      %s173 = sphi 0, %s172
      %s187 = sphi 0, %s173
      %s191 = sphi 0, %s191
      %s193 = sphi 0, %s191
      %s194 = sphi 0, %s193
      %s208 = sphi 0, %s194
      %s212 = sphi 0, %s212
      %s214 = sphi 0, %s212
      %s215 = sphi 0, %s214
      %s229 = sphi 0, %s215
      %s233 = sphi 0, %s233
      %s235 = sphi 0, %s233
      %s236 = sphi 0, %s235
      %s250 = sphi 0, %s236
      %s254 = sphi 0, %s254
      %s256 = sphi 0, %s254
      %s257 = sphi 0, %s256
      %s271 = sphi 0, %s257
      %s275 = sphi 0, %s275
      %s277 = sphi 0, %s275
      %s278 = sphi 0, %s277
      %s292 = sphi 0, %s278
      %s296 = sphi 0, %s296
      %s298 = sphi 0, %s296
      %s299 = sphi 0, %s298
      %s313 = sphi 0, %s299
      %s317 = sphi 0, %s317
      %s319 = sphi 0, %s317
      %s320 = sphi 0, %s319
      %s334 = sphi 0, %s320
      %s338 = sphi 0, %s338
      %s340 = sphi 0, %s338
      %s341 = sphi 0, %s340
      %s355 = sphi 0, %s341
      %s359 = sphi 0, %s359
      %s361 = sphi 0, %s359
      %s362 = sphi 0, %s361
      %s376 = sphi 0, %s362
      %s380 = sphi 0, %s380
      %s382 = sphi 0, %s380
      %s383 = sphi 0, %s382
      %s397 = sphi 0, %s383
      %s401 = sphi 0, %s401
      %s403 = sphi 0, %s401
      %s404 = sphi 0, %s403
      %s418 = sphi 0, %s404
      %s422 = sphi 0, %s422
      %s424 = sphi 0, %s422
      %s425 = sphi 0, %s424
      %s439 = sphi 0, %s425
      %s443 = sphi 0, %s443
      %s445 = sphi 0, %s443
      %s446 = sphi 0, %s445
      %s460 = sphi 0, %s446
      %s466 = sphi 0, %s468
      %s469 = sphi 0, %s466
      %s470 = sphi 0, %s469
      %s486 = sphi 0, %s470
    $region4: #{tpu_custom_call.1} parent=1 // loop_header_branch
      %29 = sbr.rel (%p27) target = $region8
    $region5: #{tpu_custom_call.1} parent=1 // loop_body
      %s31 = ssub.s32 %s26, 1
      %s32 = ssub.s32 %s26, 2
      %s33 = sadd.s32 %s26, 1
      %s34 = ssub.s32 %s26, %s33
      %p35 = scmp.eq.s32.totalorder %s34, 0
      %s37 = sadd.s32 %s36, 1
      %s38 = scalar_select %p35, %s36, %s37
      %p41 = pneg %p35
      %p42 = scmp.eq.s32.totalorder %s26, 1
      %p43 = por %p41, %p42
      %p44 = scmp.ne.s32.totalorder %s36, %s39
      %p45 = scmp.eq.s32.totalorder %s26, 0
      %p46 = por %p44, %p45
      %p47 = scmp.ne.s32.totalorder %s36, %s39
      %p48 = scmp.eq.s32.totalorder %s31, 1
      %p49 = por %p47, %p48
      %p50 = scmp.ne.s32.totalorder %s39, %s40
      %p51 = scmp.eq.s32.totalorder %s31, 0
      %p52 = por %p50, %p51
      %p53 = scmp.ne.s32.totalorder %s39, %s40
      %p54 = scmp.eq.s32.totalorder %s32, 1
      %p55 = por %p53, %p54
      %p57 = scmp.ne.s32.totalorder %s40, %s56
      %p58 = scmp.eq.s32.totalorder %s32, 0
      %p59 = por %p57, %p58
      %s60 = ssub.s32 %s26, %s33
      %p61 = scmp.eq.s32.totalorder %s60, 0
      %s63 = sadd.s32 %s62, 1
      %s64 = scalar_select %p61, %s62, %s63
      %p67 = pneg %p61
      %p68 = scmp.eq.s32.totalorder %s26, 1
      %p69 = por %p67, %p68
      %p70 = scmp.ne.s32.totalorder %s62, %s65
      %p71 = scmp.eq.s32.totalorder %s26, 0
      %p72 = por %p70, %p71
      %p73 = scmp.ne.s32.totalorder %s62, %s65
      %p74 = scmp.eq.s32.totalorder %s31, 1
      %p75 = por %p73, %p74
      %p76 = scmp.ne.s32.totalorder %s65, %s66
      %p77 = scmp.eq.s32.totalorder %s31, 0
      %p78 = por %p76, %p77
      %p79 = scmp.ne.s32.totalorder %s65, %s66
      %p80 = scmp.eq.s32.totalorder %s32, 1
      %p81 = por %p79, %p80
      %p83 = scmp.ne.s32.totalorder %s66, %s82
      %p84 = scmp.eq.s32.totalorder %s32, 0
      %p85 = por %p83, %p84
      %s87 = sadd.s32 %s86, 1
      %p90 = scmp.eq.s32.totalorder %s26, 1
      %p91 = scmp.ne.s32.totalorder %s86, %s88
      %p92 = scmp.eq.s32.totalorder %s26, 0
      %p93 = por %p91, %p92
      %p94 = scmp.ne.s32.totalorder %s86, %s88
      %p95 = scmp.eq.s32.totalorder %s31, 1
      %p96 = por %p94, %p95
      %p97 = scmp.ne.s32.totalorder %s88, %s89
      %p98 = scmp.eq.s32.totalorder %s31, 0
      %p99 = por %p97, %p98
      %p100 = scmp.ne.s32.totalorder %s88, %s89
      %p101 = scmp.eq.s32.totalorder %s32, 1
      %p102 = por %p100, %p101
      %p104 = scmp.ne.s32.totalorder %s89, %s103
      %p105 = scmp.eq.s32.totalorder %s32, 0
      %p106 = por %p104, %p105
      %s108 = sadd.s32 %s107, 1
      %p111 = scmp.eq.s32.totalorder %s26, 1
      %p112 = scmp.ne.s32.totalorder %s107, %s109
      %p113 = scmp.eq.s32.totalorder %s26, 0
      %p114 = por %p112, %p113
      %p115 = scmp.ne.s32.totalorder %s107, %s109
      %p116 = scmp.eq.s32.totalorder %s31, 1
      %p117 = por %p115, %p116
      %p118 = scmp.ne.s32.totalorder %s109, %s110
      %p119 = scmp.eq.s32.totalorder %s31, 0
      %p120 = por %p118, %p119
      %p121 = scmp.ne.s32.totalorder %s109, %s110
      %p122 = scmp.eq.s32.totalorder %s32, 1
      %p123 = por %p121, %p122
      %p125 = scmp.ne.s32.totalorder %s110, %s124
      %p126 = scmp.eq.s32.totalorder %s32, 0
      %p127 = por %p125, %p126
      %s129 = sadd.s32 %s128, 1
      %p132 = scmp.eq.s32.totalorder %s26, 1
      %p133 = scmp.ne.s32.totalorder %s128, %s130
      %p134 = scmp.eq.s32.totalorder %s26, 0
      %p135 = por %p133, %p134
      %p136 = scmp.ne.s32.totalorder %s128, %s130
      %p137 = scmp.eq.s32.totalorder %s31, 1
      %p138 = por %p136, %p137
      %p139 = scmp.ne.s32.totalorder %s130, %s131
      %p140 = scmp.eq.s32.totalorder %s31, 0
      %p141 = por %p139, %p140
      %p142 = scmp.ne.s32.totalorder %s130, %s131
      %p143 = scmp.eq.s32.totalorder %s32, 1
      %p144 = por %p142, %p143
      %p146 = scmp.ne.s32.totalorder %s131, %s145
      %p147 = scmp.eq.s32.totalorder %s32, 0
      %p148 = por %p146, %p147
      %s150 = sadd.s32 %s149, 1
      %p153 = scmp.eq.s32.totalorder %s26, 1
      %p154 = scmp.ne.s32.totalorder %s149, %s151
      %p155 = scmp.eq.s32.totalorder %s26, 0
      %p156 = por %p154, %p155
      %p157 = scmp.ne.s32.totalorder %s149, %s151
      %p158 = scmp.eq.s32.totalorder %s31, 1
      %p159 = por %p157, %p158
      %p160 = scmp.ne.s32.totalorder %s151, %s152
      %p161 = scmp.eq.s32.totalorder %s31, 0
      %p162 = por %p160, %p161
      %p163 = scmp.ne.s32.totalorder %s151, %s152
      %p164 = scmp.eq.s32.totalorder %s32, 1
      %p165 = por %p163, %p164
      %p167 = scmp.ne.s32.totalorder %s152, %s166
      %p168 = scmp.eq.s32.totalorder %s32, 0
      %p169 = por %p167, %p168
      %s171 = sadd.s32 %s170, 1
      %p174 = scmp.eq.s32.totalorder %s26, 1
      %p175 = scmp.ne.s32.totalorder %s170, %s172
      %p176 = scmp.eq.s32.totalorder %s26, 0
      %p177 = por %p175, %p176
      %p178 = scmp.ne.s32.totalorder %s170, %s172
      %p179 = scmp.eq.s32.totalorder %s31, 1
      %p180 = por %p178, %p179
      %p181 = scmp.ne.s32.totalorder %s172, %s173
      %p182 = scmp.eq.s32.totalorder %s31, 0
      %p183 = por %p181, %p182
      %p184 = scmp.ne.s32.totalorder %s172, %s173
      %p185 = scmp.eq.s32.totalorder %s32, 1
      %p186 = por %p184, %p185
      %p188 = scmp.ne.s32.totalorder %s173, %s187
      %p189 = scmp.eq.s32.totalorder %s32, 0
      %p190 = por %p188, %p189
      %s192 = sadd.s32 %s191, 1
      %p195 = scmp.eq.s32.totalorder %s26, 1
      %p196 = scmp.ne.s32.totalorder %s191, %s193
      %p197 = scmp.eq.s32.totalorder %s26, 0
      %p198 = por %p196, %p197
      %p199 = scmp.ne.s32.totalorder %s191, %s193
      %p200 = scmp.eq.s32.totalorder %s31, 1
      %p201 = por %p199, %p200
      %p202 = scmp.ne.s32.totalorder %s193, %s194
      %p203 = scmp.eq.s32.totalorder %s31, 0
      %p204 = por %p202, %p203
      %p205 = scmp.ne.s32.totalorder %s193, %s194
      %p206 = scmp.eq.s32.totalorder %s32, 1
      %p207 = por %p205, %p206
      %p209 = scmp.ne.s32.totalorder %s194, %s208
      %p210 = scmp.eq.s32.totalorder %s32, 0
      %p211 = por %p209, %p210
      %s213 = sadd.s32 %s212, 1
      %p216 = scmp.eq.s32.totalorder %s26, 1
      %p217 = scmp.ne.s32.totalorder %s212, %s214
      %p218 = scmp.eq.s32.totalorder %s26, 0
      %p219 = por %p217, %p218
      %p220 = scmp.ne.s32.totalorder %s212, %s214
      %p221 = scmp.eq.s32.totalorder %s31, 1
      %p222 = por %p220, %p221
      %p223 = scmp.ne.s32.totalorder %s214, %s215
      %p224 = scmp.eq.s32.totalorder %s31, 0
      %p225 = por %p223, %p224
      %p226 = scmp.ne.s32.totalorder %s214, %s215
      %p227 = scmp.eq.s32.totalorder %s32, 1
      %p228 = por %p226, %p227
      %p230 = scmp.ne.s32.totalorder %s215, %s229
      %p231 = scmp.eq.s32.totalorder %s32, 0
      %p232 = por %p230, %p231
      %s234 = sadd.s32 %s233, 1
      %p237 = scmp.eq.s32.totalorder %s26, 1
      %p238 = scmp.ne.s32.totalorder %s233, %s235
      %p239 = scmp.eq.s32.totalorder %s26, 0
      %p240 = por %p238, %p239
      %p241 = scmp.ne.s32.totalorder %s233, %s235
      %p242 = scmp.eq.s32.totalorder %s31, 1
      %p243 = por %p241, %p242
      %p244 = scmp.ne.s32.totalorder %s235, %s236
      %p245 = scmp.eq.s32.totalorder %s31, 0
      %p246 = por %p244, %p245
      %p247 = scmp.ne.s32.totalorder %s235, %s236
      %p248 = scmp.eq.s32.totalorder %s32, 1
      %p249 = por %p247, %p248
      %p251 = scmp.ne.s32.totalorder %s236, %s250
      %p252 = scmp.eq.s32.totalorder %s32, 0
      %p253 = por %p251, %p252
      %s255 = sadd.s32 %s254, 1
      %p258 = scmp.eq.s32.totalorder %s26, 1
      %p259 = scmp.ne.s32.totalorder %s254, %s256
      %p260 = scmp.eq.s32.totalorder %s26, 0
      %p261 = por %p259, %p260
      %p262 = scmp.ne.s32.totalorder %s254, %s256
      %p263 = scmp.eq.s32.totalorder %s31, 1
      %p264 = por %p262, %p263
      %p265 = scmp.ne.s32.totalorder %s256, %s257
      %p266 = scmp.eq.s32.totalorder %s31, 0
      %p267 = por %p265, %p266
      %p268 = scmp.ne.s32.totalorder %s256, %s257
      %p269 = scmp.eq.s32.totalorder %s32, 1
      %p270 = por %p268, %p269
      %p272 = scmp.ne.s32.totalorder %s257, %s271
      %p273 = scmp.eq.s32.totalorder %s32, 0
      %p274 = por %p272, %p273
      %s276 = sadd.s32 %s275, 1
      %p279 = scmp.eq.s32.totalorder %s26, 1
      %p280 = scmp.ne.s32.totalorder %s275, %s277
      %p281 = scmp.eq.s32.totalorder %s26, 0
      %p282 = por %p280, %p281
      %p283 = scmp.ne.s32.totalorder %s275, %s277
      %p284 = scmp.eq.s32.totalorder %s31, 1
      %p285 = por %p283, %p284
      %p286 = scmp.ne.s32.totalorder %s277, %s278
      %p287 = scmp.eq.s32.totalorder %s31, 0
      %p288 = por %p286, %p287
      %p289 = scmp.ne.s32.totalorder %s277, %s278
      %p290 = scmp.eq.s32.totalorder %s32, 1
      %p291 = por %p289, %p290
      %p293 = scmp.ne.s32.totalorder %s278, %s292
      %p294 = scmp.eq.s32.totalorder %s32, 0
      %p295 = por %p293, %p294
      %s297 = sadd.s32 %s296, 1
      %p300 = scmp.eq.s32.totalorder %s26, 1
      %p301 = scmp.ne.s32.totalorder %s296, %s298
      %p302 = scmp.eq.s32.totalorder %s26, 0
      %p303 = por %p301, %p302
      %p304 = scmp.ne.s32.totalorder %s296, %s298
      %p305 = scmp.eq.s32.totalorder %s31, 1
      %p306 = por %p304, %p305
      %p307 = scmp.ne.s32.totalorder %s298, %s299
      %p308 = scmp.eq.s32.totalorder %s31, 0
      %p309 = por %p307, %p308
      %p310 = scmp.ne.s32.totalorder %s298, %s299
      %p311 = scmp.eq.s32.totalorder %s32, 1
      %p312 = por %p310, %p311
      %p314 = scmp.ne.s32.totalorder %s299, %s313
      %p315 = scmp.eq.s32.totalorder %s32, 0
      %p316 = por %p314, %p315
      %s318 = sadd.s32 %s317, 1
      %p321 = scmp.eq.s32.totalorder %s26, 1
      %p322 = scmp.ne.s32.totalorder %s317, %s319
      %p323 = scmp.eq.s32.totalorder %s26, 0
      %p324 = por %p322, %p323
      %p325 = scmp.ne.s32.totalorder %s317, %s319
      %p326 = scmp.eq.s32.totalorder %s31, 1
      %p327 = por %p325, %p326
      %p328 = scmp.ne.s32.totalorder %s319, %s320
      %p329 = scmp.eq.s32.totalorder %s31, 0
      %p330 = por %p328, %p329
      %p331 = scmp.ne.s32.totalorder %s319, %s320
      %p332 = scmp.eq.s32.totalorder %s32, 1
      %p333 = por %p331, %p332
      %p335 = scmp.ne.s32.totalorder %s320, %s334
      %p336 = scmp.eq.s32.totalorder %s32, 0
      %p337 = por %p335, %p336
      %s339 = sadd.s32 %s338, 1
      %p342 = scmp.eq.s32.totalorder %s26, 1
      %p343 = scmp.ne.s32.totalorder %s338, %s340
      %p344 = scmp.eq.s32.totalorder %s26, 0
      %p345 = por %p343, %p344
      %p346 = scmp.ne.s32.totalorder %s338, %s340
      %p347 = scmp.eq.s32.totalorder %s31, 1
      %p348 = por %p346, %p347
      %p349 = scmp.ne.s32.totalorder %s340, %s341
      %p350 = scmp.eq.s32.totalorder %s31, 0
      %p351 = por %p349, %p350
      %p352 = scmp.ne.s32.totalorder %s340, %s341
      %p353 = scmp.eq.s32.totalorder %s32, 1
      %p354 = por %p352, %p353
      %p356 = scmp.ne.s32.totalorder %s341, %s355
      %p357 = scmp.eq.s32.totalorder %s32, 0
      %p358 = por %p356, %p357
      %s360 = sadd.s32 %s359, 1
      %p363 = scmp.eq.s32.totalorder %s26, 1
      %p364 = scmp.ne.s32.totalorder %s359, %s361
      %p365 = scmp.eq.s32.totalorder %s26, 0
      %p366 = por %p364, %p365
      %p367 = scmp.ne.s32.totalorder %s359, %s361
      %p368 = scmp.eq.s32.totalorder %s31, 1
      %p369 = por %p367, %p368
      %p370 = scmp.ne.s32.totalorder %s361, %s362
      %p371 = scmp.eq.s32.totalorder %s31, 0
      %p372 = por %p370, %p371
      %p373 = scmp.ne.s32.totalorder %s361, %s362
      %p374 = scmp.eq.s32.totalorder %s32, 1
      %p375 = por %p373, %p374
      %p377 = scmp.ne.s32.totalorder %s362, %s376
      %p378 = scmp.eq.s32.totalorder %s32, 0
      %p379 = por %p377, %p378
      %s381 = sadd.s32 %s380, 1
      %p384 = scmp.eq.s32.totalorder %s26, 1
      %p385 = scmp.ne.s32.totalorder %s380, %s382
      %p386 = scmp.eq.s32.totalorder %s26, 0
      %p387 = por %p385, %p386
      %p388 = scmp.ne.s32.totalorder %s380, %s382
      %p389 = scmp.eq.s32.totalorder %s31, 1
      %p390 = por %p388, %p389
      %p391 = scmp.ne.s32.totalorder %s382, %s383
      %p392 = scmp.eq.s32.totalorder %s31, 0
      %p393 = por %p391, %p392
      %p394 = scmp.ne.s32.totalorder %s382, %s383
      %p395 = scmp.eq.s32.totalorder %s32, 1
      %p396 = por %p394, %p395
      %p398 = scmp.ne.s32.totalorder %s383, %s397
      %p399 = scmp.eq.s32.totalorder %s32, 0
      %p400 = por %p398, %p399
      %s402 = sadd.s32 %s401, 1
      %p405 = scmp.eq.s32.totalorder %s26, 1
      %p406 = scmp.ne.s32.totalorder %s401, %s403
      %p407 = scmp.eq.s32.totalorder %s26, 0
      %p408 = por %p406, %p407
      %p409 = scmp.ne.s32.totalorder %s401, %s403
      %p410 = scmp.eq.s32.totalorder %s31, 1
      %p411 = por %p409, %p410
      %p412 = scmp.ne.s32.totalorder %s403, %s404
      %p413 = scmp.eq.s32.totalorder %s31, 0
      %p414 = por %p412, %p413
      %p415 = scmp.ne.s32.totalorder %s403, %s404
      %p416 = scmp.eq.s32.totalorder %s32, 1
      %p417 = por %p415, %p416
      %p419 = scmp.ne.s32.totalorder %s404, %s418
      %p420 = scmp.eq.s32.totalorder %s32, 0
      %p421 = por %p419, %p420
      %s423 = sadd.s32 %s422, 1
      %p426 = scmp.eq.s32.totalorder %s26, 1
      %p427 = scmp.ne.s32.totalorder %s422, %s424
      %p428 = scmp.eq.s32.totalorder %s26, 0
      %p429 = por %p427, %p428
      %p430 = scmp.ne.s32.totalorder %s422, %s424
      %p431 = scmp.eq.s32.totalorder %s31, 1
      %p432 = por %p430, %p431
      %p433 = scmp.ne.s32.totalorder %s424, %s425
      %p434 = scmp.eq.s32.totalorder %s31, 0
      %p435 = por %p433, %p434
      %p436 = scmp.ne.s32.totalorder %s424, %s425
      %p437 = scmp.eq.s32.totalorder %s32, 1
      %p438 = por %p436, %p437
      %p440 = scmp.ne.s32.totalorder %s425, %s439
      %p441 = scmp.eq.s32.totalorder %s32, 0
      %p442 = por %p440, %p441
      %s444 = sadd.s32 %s443, 1
      %p447 = scmp.eq.s32.totalorder %s26, 1
      %p448 = scmp.ne.s32.totalorder %s443, %s445
      %p449 = scmp.eq.s32.totalorder %s26, 0
      %p450 = por %p448, %p449
      %p451 = scmp.ne.s32.totalorder %s443, %s445
      %p452 = scmp.eq.s32.totalorder %s31, 1
      %p453 = por %p451, %p452
      %p454 = scmp.ne.s32.totalorder %s445, %s446
      %p455 = scmp.eq.s32.totalorder %s31, 0
      %p456 = por %p454, %p455
      %p457 = scmp.ne.s32.totalorder %s445, %s446
      %p458 = scmp.eq.s32.totalorder %s32, 1
      %p459 = por %p457, %p458
      %p461 = scmp.ne.s32.totalorder %s446, %s460
      %p462 = scmp.eq.s32.totalorder %s32, 0
      %p463 = por %p461, %p462
      %s464 = ssub.s32 %s26, %s33
      %p465 = scmp.eq.s32.totalorder %s464, 0
      %s467 = sadd.s32 %s466, 1
      %s468 = scalar_select %p465, %s466, %s467
      %p471 = pneg %p465
      %p472 = scmp.eq.s32.totalorder %s26, 1
      %p473 = por %p471, %p472
      %p474 = scmp.ne.s32.totalorder %s466, %s469
      %p475 = scmp.eq.s32.totalorder %s26, 0
      %p476 = por %p474, %p475
      %p477 = scmp.ne.s32.totalorder %s466, %s469
      %p478 = scmp.eq.s32.totalorder %s31, 1
      %p479 = por %p477, %p478
      %p480 = scmp.ne.s32.totalorder %s469, %s470
      %p481 = scmp.eq.s32.totalorder %s31, 0
      %p482 = por %p480, %p481
      %p483 = scmp.ne.s32.totalorder %s469, %s470
      %p484 = scmp.eq.s32.totalorder %s32, 1
      %p485 = por %p483, %p484
      %p487 = scmp.ne.s32.totalorder %s470, %s486
      %p488 = scmp.eq.s32.totalorder %s32, 0
      %p489 = por %p487, %p488
      %p490 = scmp.le.s32.totalorder 1, %s26
      %p491 = scmp.lt.s32.totalorder %s26, 3
      %p492 = pnand %p490, %p491
      %p493 = pneg %p492
      // Predicated region
      $region9: #{tpu_custom_call.1} parent=5 // pred_check
        _
      $region10: #{tpu_custom_call.1} parent=5 // pred_check_branch
        %495 = sbr.rel (%p492) target = $region12
      $region11: #{tpu_custom_call.1} parent=5 // pred_region
        %s496 = ssub.s32 %s26, 1
        // Predicated region
        $region13: #{tpu_custom_call.1} parent=11 // pred_check
          %p497 = pneg %p99
        $region14: #{tpu_custom_call.1} parent=11 // pred_check_branch
          %499 = sbr.rel (%p497) target = $region16
        $region15: #{tpu_custom_call.1} parent=11 // pred_region
          _
        $region16: #{tpu_custom_call.1} parent=11 // pred_fallthru
          _
        // Predicated region
        $region17: #{tpu_custom_call.1} parent=11 // pred_check
          %p500 = pneg %p120
        $region18: #{tpu_custom_call.1} parent=11 // pred_check_branch
          %502 = sbr.rel (%p500) target = $region20
        $region19: #{tpu_custom_call.1} parent=11 // pred_region
          _
        $region20: #{tpu_custom_call.1} parent=11 // pred_fallthru
          _
        // Predicated region
        $region21: #{tpu_custom_call.1} parent=11 // pred_check
          %p503 = pneg %p141
        $region22: #{tpu_custom_call.1} parent=11 // pred_check_branch
          %505 = sbr.rel (%p503) target = $region24
        $region23: #{tpu_custom_call.1} parent=11 // pred_region
          _
        $region24: #{tpu_custom_call.1} parent=11 // pred_fallthru
          _
        // Predicated region
        $region25: #{tpu_custom_call.1} parent=11 // pred_check
          %p506 = pneg %p162
        $region26: #{tpu_custom_call.1} parent=11 // pred_check_branch
          %508 = sbr.rel (%p506) target = $region28
        $region27: #{tpu_custom_call.1} parent=11 // pred_region
          _
        $region28: #{tpu_custom_call.1} parent=11 // pred_fallthru
          _
        // Predicated region
        $region29: #{tpu_custom_call.1} parent=11 // pred_check
          %p509 = pneg %p183
        $region30: #{tpu_custom_call.1} parent=11 // pred_check_branch
          %511 = sbr.rel (%p509) target = $region32
        $region31: #{tpu_custom_call.1} parent=11 // pred_region
          _
        $region32: #{tpu_custom_call.1} parent=11 // pred_fallthru
          _
        // Predicated region
        $region33: #{tpu_custom_call.1} parent=11 // pred_check
          %p512 = pneg %p204
        $region34: #{tpu_custom_call.1} parent=11 // pred_check_branch
          %514 = sbr.rel (%p512) target = $region36
        $region35: #{tpu_custom_call.1} parent=11 // pred_region
          _
        $region36: #{tpu_custom_call.1} parent=11 // pred_fallthru
          _
        // Predicated region
        $region37: #{tpu_custom_call.1} parent=11 // pred_check
          %p515 = pneg %p225
        $region38: #{tpu_custom_call.1} parent=11 // pred_check_branch
          %517 = sbr.rel (%p515) target = $region40
        $region39: #{tpu_custom_call.1} parent=11 // pred_region
          _
        $region40: #{tpu_custom_call.1} parent=11 // pred_fallthru
          _
        // Predicated region
        $region41: #{tpu_custom_call.1} parent=11 // pred_check
          %p518 = pneg %p246
        $region42: #{tpu_custom_call.1} parent=11 // pred_check_branch
          %520 = sbr.rel (%p518) target = $region44
        $region43: #{tpu_custom_call.1} parent=11 // pred_region
          _
        $region44: #{tpu_custom_call.1} parent=11 // pred_fallthru
          _
        // Predicated region
        $region45: #{tpu_custom_call.1} parent=11 // pred_check
          %p521 = pneg %p267
        $region46: #{tpu_custom_call.1} parent=11 // pred_check_branch
          %523 = sbr.rel (%p521) target = $region48
        $region47: #{tpu_custom_call.1} parent=11 // pred_region
          _
        $region48: #{tpu_custom_call.1} parent=11 // pred_fallthru
          _
        // Predicated region
        $region49: #{tpu_custom_call.1} parent=11 // pred_check
          %p524 = pneg %p288
        $region50: #{tpu_custom_call.1} parent=11 // pred_check_branch
          %526 = sbr.rel (%p524) target = $region52
        $region51: #{tpu_custom_call.1} parent=11 // pred_region
          _
        $region52: #{tpu_custom_call.1} parent=11 // pred_fallthru
          _
        // Predicated region
        $region53: #{tpu_custom_call.1} parent=11 // pred_check
          %p527 = pneg %p309
        $region54: #{tpu_custom_call.1} parent=11 // pred_check_branch
          %529 = sbr.rel (%p527) target = $region56
        $region55: #{tpu_custom_call.1} parent=11 // pred_region
          _
        $region56: #{tpu_custom_call.1} parent=11 // pred_fallthru
          _
        // Predicated region
        $region57: #{tpu_custom_call.1} parent=11 // pred_check
          %p530 = pneg %p330
        $region58: #{tpu_custom_call.1} parent=11 // pred_check_branch
          %532 = sbr.rel (%p530) target = $region60
        $region59: #{tpu_custom_call.1} parent=11 // pred_region
          _
        $region60: #{tpu_custom_call.1} parent=11 // pred_fallthru
          _
        // Predicated region
        $region61: #{tpu_custom_call.1} parent=11 // pred_check
          %p533 = pneg %p351
        $region62: #{tpu_custom_call.1} parent=11 // pred_check_branch
          %535 = sbr.rel (%p533) target = $region64
        $region63: #{tpu_custom_call.1} parent=11 // pred_region
          _
        $region64: #{tpu_custom_call.1} parent=11 // pred_fallthru
          _
        // Predicated region
        $region65: #{tpu_custom_call.1} parent=11 // pred_check
          %p536 = pneg %p372
        $region66: #{tpu_custom_call.1} parent=11 // pred_check_branch
          %538 = sbr.rel (%p536) target = $region68
        $region67: #{tpu_custom_call.1} parent=11 // pred_region
          _
        $region68: #{tpu_custom_call.1} parent=11 // pred_fallthru
          _
        // Predicated region
        $region69: #{tpu_custom_call.1} parent=11 // pred_check
          %p539 = pneg %p393
        $region70: #{tpu_custom_call.1} parent=11 // pred_check_branch
          %541 = sbr.rel (%p539) target = $region72
        $region71: #{tpu_custom_call.1} parent=11 // pred_region
          _
        $region72: #{tpu_custom_call.1} parent=11 // pred_fallthru
          _
        // Predicated region
        $region73: #{tpu_custom_call.1} parent=11 // pred_check
          %p542 = pneg %p414
        $region74: #{tpu_custom_call.1} parent=11 // pred_check_branch
          %544 = sbr.rel (%p542) target = $region76
        $region75: #{tpu_custom_call.1} parent=11 // pred_region
          _
        $region76: #{tpu_custom_call.1} parent=11 // pred_fallthru
          _
        // Predicated region
        $region77: #{tpu_custom_call.1} parent=11 // pred_check
          %p545 = pneg %p435
        $region78: #{tpu_custom_call.1} parent=11 // pred_check_branch
          %547 = sbr.rel (%p545) target = $region80
        $region79: #{tpu_custom_call.1} parent=11 // pred_region
          _
        $region80: #{tpu_custom_call.1} parent=11 // pred_fallthru
          _
        // Predicated region
        $region81: #{tpu_custom_call.1} parent=11 // pred_check
          %p548 = pneg %p456
        $region82: #{tpu_custom_call.1} parent=11 // pred_check_branch
          %550 = sbr.rel (%p548) target = $region84
        $region83: #{tpu_custom_call.1} parent=11 // pred_region
          _
        $region84: #{tpu_custom_call.1} parent=11 // pred_fallthru
          _
      $region12: #{tpu_custom_call.1} parent=5 // pred_fallthru
        _
      %p551 = scmp.lt.s32.totalorder %s26, 2
      // Predicated region
      $region85: #{tpu_custom_call.1} parent=5 // pred_check
        %p552 = pneg %p551
      $region86: #{tpu_custom_call.1} parent=5 // pred_check_branch
        %554 = sbr.rel (%p552) target = $region88
      $region87: #{tpu_custom_call.1} parent=5 // pred_region
        // Predicated region
        $region89: #{tpu_custom_call.1} parent=87 // pred_check
          %p555 = pneg %p46
        $region90: #{tpu_custom_call.1} parent=87 // pred_check_branch
          %557 = sbr.rel (%p555) target = $region92
        $region91: #{tpu_custom_call.1} parent=87 // pred_region
          %s558 = sand.u32 %s36, 1
          %s559 = sand.u32 %s36, 1
          %s560 = smul.addr %s559, 24
          %s561 = scalar_lea.vmem [#allocation7], %s560
          %s562 = smul.addr %s26, 8
          %s563 = scalar_lea.vmem %s0, %s562
          // Predicated region
          $region93: #{tpu_custom_call.1} parent=91 // pred_check
            _
          $region94: #{tpu_custom_call.1} parent=91 // pred_check_branch
            %565 = sbr.rel (0) target = $region96
          $region95: #{tpu_custom_call.1} parent=91 // pred_region
            // Predicated region
            $region97: #{tpu_custom_call.1} parent=95 // pred_check
              _
            $region98: #{tpu_custom_call.1} parent=95 // pred_check_branch
              %567 = sbr.rel (0) target = $region100
            $region99: #{tpu_custom_call.1} parent=95 // pred_region
              // Predicated region
              $region112: #{tpu_custom_call.1} parent=99 // pred_check
                _
              $region113: #{tpu_custom_call.1} parent=99 // pred_check_branch
                %587 = sbr.rel (0) target = $region115
              $region114: #{tpu_custom_call.1} parent=99 // pred_region
                loop: start=0, step=1, limit=1
                $region116: #{tpu_custom_call.1} parent=114 // loop_pre_header
                  _
                $region117: #{tpu_custom_call.1} parent=114 // loop_header
                  %s589 = sphi 0, %s593
                  %p590 = scmp.ge.s32.totalorder %s589, 1
                  %s594 = sphi %s563, %s563
                  %s595 = sphi %s561, %s561
                $region118: #{tpu_custom_call.1} parent=114 // loop_header_branch
                  %592 = sbr.rel (%p590) target = $region122
                $region119: #{tpu_custom_call.1} parent=114 // loop_body
                  %v596 = vld [vmem:[%s594] sm:$0xff]
                  %597 = vst [vmem:[%s595] sm:$0xff] %v596
                  %v598 = vld [vmem:[%s594 + $0x10] sm:$0xff]
                  %599 = vst [vmem:[%s595 + $0x8] sm:$0xff] %v598
                  %v600 = vld [vmem:[%s594 + $0x20] sm:$0xff]
                  %601 = vst [vmem:[%s595 + $0x10] sm:$0xff] %v600
                $region120: #{tpu_custom_call.1} parent=114 // loop_footer
                  %s593 = sadd.s32 1, %s589
                $region121: #{tpu_custom_call.1} parent=114 // loop_footer_branch
                  %588 = sbr.rel target = $region117
                $region122: #{tpu_custom_call.1} parent=114 // loop_exit
                  _
              $region115: #{tpu_custom_call.1} parent=99 // pred_fallthru
                _
              // Predicated region
              $region123: #{tpu_custom_call.1} parent=99 // pred_check
                _
              $region124: #{tpu_custom_call.1} parent=99 // pred_check_branch
                %603 = sbr.rel target = $region126
              $region125: #{tpu_custom_call.1} parent=99 // pred_region
                _
              $region126: #{tpu_custom_call.1} parent=99 // pred_fallthru
                _
            $region100: #{tpu_custom_call.1} parent=95 // pred_fallthru
              _
            // Predicated region
            $region101: #{tpu_custom_call.1} parent=95 // pred_check
              _
            $region102: #{tpu_custom_call.1} parent=95 // pred_check_branch
              %569 = sbr.rel target = $region104
            $region103: #{tpu_custom_call.1} parent=95 // pred_region
              %s571 = ssub.s32 256, 1
              loop: start=0, step=1, limit=1
              $region105: #{tpu_custom_call.1} parent=103 // loop_pre_header
                _
              $region106: #{tpu_custom_call.1} parent=103 // loop_header
                %s573 = sphi 0, %s577
                %p574 = scmp.ge.s32.totalorder %s573, 1
                %s578 = sphi %s563, %s563
                %s579 = sphi %s561, %s561
              $region107: #{tpu_custom_call.1} parent=103 // loop_header_branch
                %576 = sbr.rel (%p574) target = $region111
              $region108: #{tpu_custom_call.1} parent=103 // loop_body
                %v580 = vld [vmem:[%s578] sm:%s571]
                %581 = vst [vmem:[%s579] sm:%s571] %v580
                %v582 = vld [vmem:[%s578 + $0x10] sm:%s571]
                %583 = vst [vmem:[%s579 + $0x8] sm:%s571] %v582
                %v584 = vld [vmem:[%s578 + $0x20] sm:%s571]
                %585 = vst [vmem:[%s579 + $0x10] sm:%s571] %v584
              $region109: #{tpu_custom_call.1} parent=103 // loop_footer
                %s577 = sadd.s32 1, %s573
              $region110: #{tpu_custom_call.1} parent=103 // loop_footer_branch
                %572 = sbr.rel target = $region106
              $region111: #{tpu_custom_call.1} parent=103 // loop_exit
                _
            $region104: #{tpu_custom_call.1} parent=95 // pred_fallthru
              _
          $region96: #{tpu_custom_call.1} parent=91 // pred_fallthru
            _
          %604 = vnop
        $region92: #{tpu_custom_call.1} parent=87 // pred_fallthru
          _
        // Predicated region
        $region127: #{tpu_custom_call.1} parent=87 // pred_check
          %p605 = pneg %p72
        $region128: #{tpu_custom_call.1} parent=87 // pred_check_branch
          %607 = sbr.rel (%p605) target = $region130
        $region129: #{tpu_custom_call.1} parent=87 // pred_region
          %s608 = sand.u32 %s62, 1
          %s609 = sand.u32 %s62, 1
          %s610 = smul.addr %s609, 24
          %s611 = scalar_lea.vmem [#allocation8], %s610
          %s612 = smul.addr %s26, 8
          %s613 = scalar_lea.vmem %s1, %s612
          // Predicated region
          $region131: #{tpu_custom_call.1} parent=129 // pred_check
            _
          $region132: #{tpu_custom_call.1} parent=129 // pred_check_branch
            %615 = sbr.rel (0) target = $region134
          $region133: #{tpu_custom_call.1} parent=129 // pred_region
            // Predicated region
            $region135: #{tpu_custom_call.1} parent=133 // pred_check
              _
            $region136: #{tpu_custom_call.1} parent=133 // pred_check_branch
              %617 = sbr.rel (0) target = $region138
            $region137: #{tpu_custom_call.1} parent=133 // pred_region
              // Predicated region
              $region150: #{tpu_custom_call.1} parent=137 // pred_check
                _
              $region151: #{tpu_custom_call.1} parent=137 // pred_check_branch
                %637 = sbr.rel (0) target = $region153
              $region152: #{tpu_custom_call.1} parent=137 // pred_region
                loop: start=0, step=1, limit=1
                $region154: #{tpu_custom_call.1} parent=152 // loop_pre_header
                  _
                $region155: #{tpu_custom_call.1} parent=152 // loop_header
                  %s639 = sphi 0, %s643
                  %p640 = scmp.ge.s32.totalorder %s639, 1
                  %s644 = sphi %s613, %s613
                  %s645 = sphi %s611, %s611
                $region156: #{tpu_custom_call.1} parent=152 // loop_header_branch
                  %642 = sbr.rel (%p640) target = $region160
                $region157: #{tpu_custom_call.1} parent=152 // loop_body
                  %v646 = vld [vmem:[%s644] sm:$0xff]
                  %647 = vst [vmem:[%s645] sm:$0xff] %v646
                  %v648 = vld [vmem:[%s644 + $0x10] sm:$0xff]
                  %649 = vst [vmem:[%s645 + $0x8] sm:$0xff] %v648
                  %v650 = vld [vmem:[%s644 + $0x20] sm:$0xff]
                  %651 = vst [vmem:[%s645 + $0x10] sm:$0xff] %v650
                $region158: #{tpu_custom_call.1} parent=152 // loop_footer
                  %s643 = sadd.s32 1, %s639
                $region159: #{tpu_custom_call.1} parent=152 // loop_footer_branch
                  %638 = sbr.rel target = $region155
                $region160: #{tpu_custom_call.1} parent=152 // loop_exit
                  _
              $region153: #{tpu_custom_call.1} parent=137 // pred_fallthru
                _
              // Predicated region
              $region161: #{tpu_custom_call.1} parent=137 // pred_check
                _
              $region162: #{tpu_custom_call.1} parent=137 // pred_check_branch
                %653 = sbr.rel target = $region164
              $region163: #{tpu_custom_call.1} parent=137 // pred_region
                _
              $region164: #{tpu_custom_call.1} parent=137 // pred_fallthru
                _
            $region138: #{tpu_custom_call.1} parent=133 // pred_fallthru
              _
            // Predicated region
            $region139: #{tpu_custom_call.1} parent=133 // pred_check
              _
            $region140: #{tpu_custom_call.1} parent=133 // pred_check_branch
              %619 = sbr.rel target = $region142
            $region141: #{tpu_custom_call.1} parent=133 // pred_region
              %s621 = ssub.s32 256, 1
              loop: start=0, step=1, limit=1
              $region143: #{tpu_custom_call.1} parent=141 // loop_pre_header
                _
              $region144: #{tpu_custom_call.1} parent=141 // loop_header
                %s623 = sphi 0, %s627
                %p624 = scmp.ge.s32.totalorder %s623, 1
                %s628 = sphi %s613, %s613
                %s629 = sphi %s611, %s611
              $region145: #{tpu_custom_call.1} parent=141 // loop_header_branch
                %626 = sbr.rel (%p624) target = $region149
              $region146: #{tpu_custom_call.1} parent=141 // loop_body
                %v630 = vld [vmem:[%s628] sm:%s621]
                %631 = vst [vmem:[%s629] sm:%s621] %v630
                %v632 = vld [vmem:[%s628 + $0x10] sm:%s621]
                %633 = vst [vmem:[%s629 + $0x8] sm:%s621] %v632
                %v634 = vld [vmem:[%s628 + $0x20] sm:%s621]
                %635 = vst [vmem:[%s629 + $0x10] sm:%s621] %v634
              $region147: #{tpu_custom_call.1} parent=141 // loop_footer
                %s627 = sadd.s32 1, %s623
              $region148: #{tpu_custom_call.1} parent=141 // loop_footer_branch
                %622 = sbr.rel target = $region144
              $region149: #{tpu_custom_call.1} parent=141 // loop_exit
                _
            $region142: #{tpu_custom_call.1} parent=133 // pred_fallthru
              _
          $region134: #{tpu_custom_call.1} parent=129 // pred_fallthru
            _
          %654 = vnop
        $region130: #{tpu_custom_call.1} parent=87 // pred_fallthru
          _
      $region88: #{tpu_custom_call.1} parent=5 // pred_fallthru
        _
      %p655 = scmp.le.s32.totalorder 1, %s26
      %p656 = scmp.lt.s32.totalorder %s26, 3
      %p657 = pnand %p655, %p656
      %p658 = pneg %p657
      // Predicated region
      $region165: #{tpu_custom_call.1} parent=5 // pred_check
        _
      $region166: #{tpu_custom_call.1} parent=5 // pred_check_branch
        %660 = sbr.rel (%p657) target = $region168
      $region167: #{tpu_custom_call.1} parent=5 // pred_region
        %s661 = ssub.s32 %s26, 1
        %s662 = sand.u32 %s39, 1
        %s663 = sand.u32 %s39, 1
        %s664 = smul.addr %s663, 24
        %s665 = scalar_lea.vmem [#allocation7], %s664
        // Predicated region
        $region169: #{tpu_custom_call.1} parent=167 // pred_check
          %p666 = pneg %p52
        $region170: #{tpu_custom_call.1} parent=167 // pred_check_branch
          %668 = sbr.rel (%p666) target = $region172
        $region171: #{tpu_custom_call.1} parent=167 // pred_region
          _
        $region172: #{tpu_custom_call.1} parent=167 // pred_fallthru
          _
        %s669 = sand.u32 %s65, 1
        %s670 = sand.u32 %s65, 1
        %s671 = smul.addr %s670, 24
        %s672 = scalar_lea.vmem [#allocation8], %s671
        // Predicated region
        $region173: #{tpu_custom_call.1} parent=167 // pred_check
          %p673 = pneg %p78
        $region174: #{tpu_custom_call.1} parent=167 // pred_check_branch
          %675 = sbr.rel (%p673) target = $region176
        $region175: #{tpu_custom_call.1} parent=167 // pred_region
          _
        $region176: #{tpu_custom_call.1} parent=167 // pred_fallthru
          _
        %s676 = sand.u32 %s39, 1
        %s677 = sand.u32 %s39, 1
        %s678 = smul.addr %s677, 24
        %s679 = scalar_lea.vmem [#allocation7], %s678
        %p680 = pneg %p52
        %p681 = pneg %p49
        %s682 = sand.u32 %s65, 1
        %s683 = sand.u32 %s65, 1
        %s684 = smul.addr %s683, 24
        %s685 = scalar_lea.vmem [#allocation8], %s684
        %p686 = pneg %p78
        %p687 = pneg %p75
        %p688 = pneg %p99
        %p689 = pneg %p96
        %p690 = pneg %p120
        %p691 = pneg %p117
        %p692 = pneg %p141
        %p693 = pneg %p138
        %p694 = pneg %p162
        %p695 = pneg %p159
        %p696 = pneg %p183
        %p697 = pneg %p180
        %p698 = pneg %p204
        %p699 = pneg %p201
        %p700 = pneg %p225
        %p701 = pneg %p222
        %p702 = pneg %p246
        %p703 = pneg %p243
        %p704 = pneg %p267
        %p705 = pneg %p264
        %p706 = pneg %p288
        %p707 = pneg %p285
        %p708 = pneg %p309
        %p709 = pneg %p306
        %p710 = pneg %p330
        %p711 = pneg %p327
        %p712 = pneg %p351
        %p713 = pneg %p348
        %p714 = pneg %p372
        %p715 = pneg %p369
        %p716 = pneg %p393
        %p717 = pneg %p390
        %p718 = pneg %p414
        %p719 = pneg %p411
        %p720 = pneg %p435
        %p721 = pneg %p432
        %p722 = pneg %p456
        %p723 = pneg %p453
        %p724 = pneg %p482
        %p725 = pneg %p479
        %s726 = sand.u32 %s469, 1
        %s727 = sand.u32 %s469, 1
        %s728 = smul.addr %s727, 24
        %s729 = scalar_lea.vmem [#allocation9], %s728
        %v731 = vld [vmem:[%s665] sm:$0xff]
        %v732 = vld [vmem:[%s2] sm:$0x1]
        %v734 = vperm.slane %v732, 0
        %v736 = vsub.f32 %v731, %v734
        %v737 = vld [vmem:[%s3] sm:$0x1]
        %v739 = vperm.slane %v737, 0
        %v741 = vmul.f32 %v736, %v739
        %v742 = vld [vmem:[%s672] sm:$0xff]
        %v743 = vld [vmem:[%s4] sm:$0x1]
        %v745 = vperm.slane %v743, 0
        %v747 = vsub.f32 %v742, %v745
        %v748 = vld [vmem:[%s5] sm:$0x1]
        %v750 = vperm.slane %v748, 0
        %v752 = vmul.f32 %v747, %v750
        %v753 = vpack.c.bf16 %v741, %v741
        %v754 = vpack.c.bf16 %v752, %v752
        %v755 = vld [vmem:[%s6] sm:$0xf]
        %v756 = vld [vmem:[%s6 + $0x4] sm:$0x1]
        %v757 = vld [vmem:[%s7] sm:$0x7]
        %vm758 = vcmask 39936
        %v760 = vsel %vm758, %v754, 0
        %vm762 = vcmask 1041408
        %vm763 = vcmask 1042432
        %v764 = vsel %vm762, 4294967295, 65535
        %v765 = vsel %vm763, %v764, 0
        %v767 = vand.u32 %v757, %v765
        %769 = vmatpush.bf16.msra.mxu0 0
        %770 = vmatpush.bf16.msra.mxu0 0
        %771 = vmatpush.bf16.msra.mxu0 0
        %772 = vmatpush.bf16.msra.mxu0 0
        %773 = vmatpush.bf16.msra.mxu0 0
        %774 = vmatpush.bf16.msra.mxu0 0
        %775 = vmatpush.bf16.msra.mxu0 0
        %776 = vmatpush.bf16.msra.mxu0 %v767
        %777 = vmatmul.bf16.gmra.mxu0 %v760
        %v778 = vpop.f32.mrf.mxu0
        %v779 = vadd.f32 0.0, %v778
        %v780 = vpop.f32.mrf.mxu0
        %781 = vdwg.mxu0
        %v784 = vunpack.c.l.b16 %v755
        %v785 = vunpack.c.l.b16 %v756
        %v786 = vpack.c.b16 %v785, %v784
        %vm787 = vcmask 80896
        %v789 = vsel %vm787, %v753, 0
        %vm791 = vcmask 1044480
        %v793 = vsel %vm791, %v786, 0
        %795 = vmatpush.bf16.msra.mxu0 0
        %796 = vmatpush.bf16.msra.mxu0 0
        %797 = vmatpush.bf16.msra.mxu0 0
        %798 = vmatpush.bf16.msra.mxu0 0
        %799 = vmatpush.bf16.msra.mxu0 0
        %800 = vmatpush.bf16.msra.mxu0 0
        %801 = vmatpush.bf16.msra.mxu0 0
        %802 = vmatpush.bf16.msra.mxu0 %v793
        %803 = vmatmul.bf16.gmra.mxu0 %v789
        %v804 = vpop.f32.mrf.mxu0
        %v805 = vadd.f32 %v779, %v804
        %v806 = vpop.f32.mrf.mxu0
        %807 = vdwg.mxu0
        %v808 = vld [vmem:[%s8] sm:$0x1]
        %v810 = vperm.slane %v808, 0
        %v812 = vadd.f32 %v805, %v810
        %vm813 = vcmp.ge.f32.partialorder %v812, 0.0
        %v814 = vmul.f32 %v812, 0.01
        %v815 = vsel %vm813, %v812, %v814
        %v816 = vld [vmem:[%s9] sm:$0xf]
        %v817 = vld [vmem:[%s9 + $0x4] sm:$0x1]
        %v818 = vld [vmem:[%s10] sm:$0x1]
        %v820 = vperm.slane %v818, 0
        %v824 = vunpack.c.l.b16 %v816
        %v825 = vunpack.c.l.b16 %v817
        %v826 = vpack.c.b16 %v825, %v824
        %v828 = vsel %vm791, %v826, 0
        %830 = vmatpush.bf16.msra.mxu0 0
        %831 = vmatpush.bf16.msra.mxu0 0
        %832 = vmatpush.bf16.msra.mxu0 0
        %833 = vmatpush.bf16.msra.mxu0 0
        %834 = vmatpush.bf16.msra.mxu0 0
        %835 = vmatpush.bf16.msra.mxu0 0
        %836 = vmatpush.bf16.msra.mxu0 0
        %837 = vmatpush.bf16.msra.mxu0 %v828
        %838 = vmatmul.bf16.gmra.mxu0 %v789
        %v839 = vpop.f32.mrf.mxu0
        %v840 = vadd.f32 %v820, %v839
        %v841 = vpop.f32.mrf.mxu0
        %842 = vdwg.mxu0
        %vm843 = vcmp.ge.f32.partialorder %v840, 0.0
        %v844 = vmul.f32 %v840, 0.01
        %v845 = vsel %vm843, %v840, %v844
        %vm846 = vcmask 261120
        %847 = vst.msk [vmem:[#allocation2] sm:$0xff] %vm846, %v815
        %848 = vst.msk [vmem:[#allocation3] sm:$0xff] %vm846, %v845
        %s849 = scalar_lea.vmem %s665, 8 [#allocation7]
        %v850 = vld [vmem:[%s849] sm:$0xff]
        %s851 = scalar_lea.vmem %s2, 1
        %v852 = vld [vmem:[%s851] sm:$0x1]
        %v854 = vperm.slane %v852, 0
        %v856 = vsub.f32 %v850, %v854
        %s857 = scalar_lea.vmem %s3, 1
        %v858 = vld [vmem:[%s857] sm:$0x1]
        %v860 = vperm.slane %v858, 0
        %v862 = vmul.f32 %v856, %v860
        %s863 = scalar_lea.vmem %s672, 8 [#allocation8]
        %v864 = vld [vmem:[%s863] sm:$0xff]
        %s865 = scalar_lea.vmem %s4, 1
        %v866 = vld [vmem:[%s865] sm:$0x1]
        %v868 = vperm.slane %v866, 0
        %v870 = vsub.f32 %v864, %v868
        %s871 = scalar_lea.vmem %s5, 1
        %v872 = vld [vmem:[%s871] sm:$0x1]
        %v874 = vperm.slane %v872, 0
        %v876 = vmul.f32 %v870, %v874
        %v877 = vpack.c.bf16 %v862, %v862
        %v878 = vpack.c.bf16 %v876, %v876
        %s879 = scalar_lea.vmem %s6, 8
        %v880 = vld [vmem:[%s879] sm:$0xf]
        %v881 = vld [vmem:[%s879 + $0x4] sm:$0x1]
        %s882 = scalar_lea.vmem %s7, 4
        %v883 = vld [vmem:[%s882] sm:$0x7]
        %v885 = vsel %vm758, %v878, 0
        %v888 = vand.u32 %v883, %v765
        %890 = vmatpush.bf16.msra.mxu0 0
        %891 = vmatpush.bf16.msra.mxu0 0
        %892 = vmatpush.bf16.msra.mxu0 0
        %893 = vmatpush.bf16.msra.mxu0 0
        %894 = vmatpush.bf16.msra.mxu0 0
        %895 = vmatpush.bf16.msra.mxu0 0
        %896 = vmatpush.bf16.msra.mxu0 0
        %897 = vmatpush.bf16.msra.mxu0 %v888
        %898 = vmatmul.bf16.gmra.mxu0 %v885
        %v899 = vpop.f32.mrf.mxu0
        %v900 = vadd.f32 0.0, %v899
        %v901 = vpop.f32.mrf.mxu0
        %902 = vdwg.mxu0
        %v905 = vunpack.c.l.b16 %v880
        %v906 = vunpack.c.l.b16 %v881
        %v907 = vpack.c.b16 %v906, %v905
        %v909 = vsel %vm787, %v877, 0
        %v912 = vsel %vm791, %v907, 0
        %914 = vmatpush.bf16.msra.mxu0 0
        %915 = vmatpush.bf16.msra.mxu0 0
        %916 = vmatpush.bf16.msra.mxu0 0
        %917 = vmatpush.bf16.msra.mxu0 0
        %918 = vmatpush.bf16.msra.mxu0 0
        %919 = vmatpush.bf16.msra.mxu0 0
        %920 = vmatpush.bf16.msra.mxu0 0
        %921 = vmatpush.bf16.msra.mxu0 %v912
        %922 = vmatmul.bf16.gmra.mxu0 %v909
        %v923 = vpop.f32.mrf.mxu0
        %v924 = vadd.f32 %v900, %v923
        %v925 = vpop.f32.mrf.mxu0
        %926 = vdwg.mxu0
        %s927 = scalar_lea.vmem %s8, 1
        %v928 = vld [vmem:[%s927] sm:$0x1]
        %v930 = vperm.slane %v928, 0
        %v932 = vadd.f32 %v924, %v930
        %vm933 = vcmp.ge.f32.partialorder %v932, 0.0
        %v934 = vmul.f32 %v932, 0.01
        %v935 = vsel %vm933, %v932, %v934
        %s936 = scalar_lea.vmem %s9, 8
        %v937 = vld [vmem:[%s936] sm:$0xf]
        %v938 = vld [vmem:[%s936 + $0x4] sm:$0x1]
        %s939 = scalar_lea.vmem %s10, 1
        %v940 = vld [vmem:[%s939] sm:$0x1]
        %v942 = vperm.slane %v940, 0
        %v946 = vunpack.c.l.b16 %v937
        %v947 = vunpack.c.l.b16 %v938
        %v948 = vpack.c.b16 %v947, %v946
        %v950 = vsel %vm791, %v948, 0
        %952 = vmatpush.bf16.msra.mxu0 0
        %953 = vmatpush.bf16.msra.mxu0 0
        %954 = vmatpush.bf16.msra.mxu0 0
        %955 = vmatpush.bf16.msra.mxu0 0
        %956 = vmatpush.bf16.msra.mxu0 0
        %957 = vmatpush.bf16.msra.mxu0 0
        %958 = vmatpush.bf16.msra.mxu0 0
        %959 = vmatpush.bf16.msra.mxu0 %v950
        %960 = vmatmul.bf16.gmra.mxu0 %v909
        %v961 = vpop.f32.mrf.mxu0
        %v962 = vadd.f32 %v942, %v961
        %v963 = vpop.f32.mrf.mxu0
        %964 = vdwg.mxu0
        %vm965 = vcmp.ge.f32.partialorder %v962, 0.0
        %v966 = vmul.f32 %v962, 0.01
        %v967 = vsel %vm965, %v962, %v966
        %968 = vst.msk [vmem:[#allocation2 + $0x8] sm:$0xff] %vm846, %v935
        %969 = vst.msk [vmem:[#allocation3 + $0x8] sm:$0xff] %vm846, %v967
        %s970 = scalar_lea.vmem %s665, 16 [#allocation7]
        %v971 = vld [vmem:[%s970] sm:$0xff]
        %s972 = scalar_lea.vmem %s2, 2
        %v973 = vld [vmem:[%s972] sm:$0x1]
        %v975 = vperm.slane %v973, 0
        %v977 = vsub.f32 %v971, %v975
        %s978 = scalar_lea.vmem %s3, 2
        %v979 = vld [vmem:[%s978] sm:$0x1]
        %v981 = vperm.slane %v979, 0
        %v983 = vmul.f32 %v977, %v981
        %s984 = scalar_lea.vmem %s672, 16 [#allocation8]
        %v985 = vld [vmem:[%s984] sm:$0xff]
        %s986 = scalar_lea.vmem %s4, 2
        %v987 = vld [vmem:[%s986] sm:$0x1]
        %v989 = vperm.slane %v987, 0
        %v991 = vsub.f32 %v985, %v989
        %s992 = scalar_lea.vmem %s5, 2
        %v993 = vld [vmem:[%s992] sm:$0x1]
        %v995 = vperm.slane %v993, 0
        %v997 = vmul.f32 %v991, %v995
        %v998 = vpack.c.bf16 %v983, %v983
        %v999 = vpack.c.bf16 %v997, %v997
        %s1000 = scalar_lea.vmem %s6, 16
        %v1001 = vld [vmem:[%s1000] sm:$0xf]
        %v1002 = vld [vmem:[%s1000 + $0x4] sm:$0x1]
        %s1003 = scalar_lea.vmem %s7, 8
        %v1004 = vld [vmem:[%s1003] sm:$0x7]
        %v1006 = vsel %vm758, %v999, 0
        %v1009 = vand.u32 %v1004, %v765
        %1011 = vmatpush.bf16.msra.mxu0 0
        %1012 = vmatpush.bf16.msra.mxu0 0
        %1013 = vmatpush.bf16.msra.mxu0 0
        %1014 = vmatpush.bf16.msra.mxu0 0
        %1015 = vmatpush.bf16.msra.mxu0 0
        %1016 = vmatpush.bf16.msra.mxu0 0
        %1017 = vmatpush.bf16.msra.mxu0 0
        %1018 = vmatpush.bf16.msra.mxu0 %v1009
        %1019 = vmatmul.bf16.gmra.mxu0 %v1006
        %v1020 = vpop.f32.mrf.mxu0
        %v1021 = vadd.f32 0.0, %v1020
        %v1022 = vpop.f32.mrf.mxu0
        %1023 = vdwg.mxu0
        %v1026 = vunpack.c.l.b16 %v1001
        %v1027 = vunpack.c.l.b16 %v1002
        %v1028 = vpack.c.b16 %v1027, %v1026
        %v1030 = vsel %vm787, %v998, 0
        %v1033 = vsel %vm791, %v1028, 0
        %1035 = vmatpush.bf16.msra.mxu0 0
        %1036 = vmatpush.bf16.msra.mxu0 0
        %1037 = vmatpush.bf16.msra.mxu0 0
        %1038 = vmatpush.bf16.msra.mxu0 0
        %1039 = vmatpush.bf16.msra.mxu0 0
        %1040 = vmatpush.bf16.msra.mxu0 0
        %1041 = vmatpush.bf16.msra.mxu0 0
        %1042 = vmatpush.bf16.msra.mxu0 %v1033
        %1043 = vmatmul.bf16.gmra.mxu0 %v1030
        %v1044 = vpop.f32.mrf.mxu0
        %v1045 = vadd.f32 %v1021, %v1044
        %v1046 = vpop.f32.mrf.mxu0
        %1047 = vdwg.mxu0
        %s1048 = scalar_lea.vmem %s8, 2
        %v1049 = vld [vmem:[%s1048] sm:$0x1]
        %v1051 = vperm.slane %v1049, 0
        %v1053 = vadd.f32 %v1045, %v1051
        %vm1054 = vcmp.ge.f32.partialorder %v1053, 0.0
        %v1055 = vmul.f32 %v1053, 0.01
        %v1056 = vsel %vm1054, %v1053, %v1055
        %s1057 = scalar_lea.vmem %s9, 16
        %v1058 = vld [vmem:[%s1057] sm:$0xf]
        %v1059 = vld [vmem:[%s1057 + $0x4] sm:$0x1]
        %s1060 = scalar_lea.vmem %s10, 2
        %v1061 = vld [vmem:[%s1060] sm:$0x1]
        %v1063 = vperm.slane %v1061, 0
        %v1067 = vunpack.c.l.b16 %v1058
        %v1068 = vunpack.c.l.b16 %v1059
        %v1069 = vpack.c.b16 %v1068, %v1067
        %v1071 = vsel %vm791, %v1069, 0
        %1073 = vmatpush.bf16.msra.mxu0 0
        %1074 = vmatpush.bf16.msra.mxu0 0
        %1075 = vmatpush.bf16.msra.mxu0 0
        %1076 = vmatpush.bf16.msra.mxu0 0
        %1077 = vmatpush.bf16.msra.mxu0 0
        %1078 = vmatpush.bf16.msra.mxu0 0
        %1079 = vmatpush.bf16.msra.mxu0 0
        %1080 = vmatpush.bf16.msra.mxu0 %v1071
        %1081 = vmatmul.bf16.gmra.mxu0 %v1030
        %v1082 = vpop.f32.mrf.mxu0
        %v1083 = vadd.f32 %v1063, %v1082
        %v1084 = vpop.f32.mrf.mxu0
        %1085 = vdwg.mxu0
        %vm1086 = vcmp.ge.f32.partialorder %v1083, 0.0
        %v1087 = vmul.f32 %v1083, 0.01
        %v1088 = vsel %vm1086, %v1083, %v1087
        %1089 = vst.msk [vmem:[#allocation2 + $0x10] sm:$0xff] %vm846, %v1056
        %1090 = vst.msk [vmem:[#allocation3 + $0x10] sm:$0xff] %vm846, %v1088
        %v1091 = vld [vmem:[#allocation2] sm:$0xff]
        %v1092 = vld [vmem:[#allocation2 + $0x8] sm:$0xff]
        %v1093 = vld [vmem:[#allocation2 + $0x10] sm:$0xff]
        %v1094 = vpack.c.bf16 %v1092, %v1091
        %v1095 = vpack.c.bf16 %v1093, %v1093
        %v1096 = vld [vmem:[#allocation3] sm:$0xff]
        %v1097 = vld [vmem:[#allocation3 + $0x8] sm:$0xff]
        %v1098 = vld [vmem:[#allocation3 + $0x10] sm:$0xff]
        %v1099 = vpack.c.bf16 %v1097, %v1096
        %v1100 = vpack.c.bf16 %v1098, %v1098
        %v1101 = vld [vmem:[%s11] sm:$0xf]
        %v1102 = vld [vmem:[%s11 + $0x4] sm:$0xf]
        %v1103 = vld [vmem:[%s11 + $0x8] sm:$0xf]
        %v1104 = vld [vmem:[%s11 + $0xc] sm:$0xf]
        %v1109 = vunpack.c.l.b16 %v1101
        %v1110 = vunpack.c.l.b16 %v1102
        %v1111 = vunpack.c.l.b16 %v1103
        %v1112 = vunpack.c.l.b16 %v1104
        %v1113 = vpack.c.b16 %v1110, %v1109
        %v1114 = vpack.c.b16 %v1112, %v1111
        %v1118 = vsel %vm846, %v1094, 0
        %v1121 = vsel %vm846, %v1095, 0
        %1123 = vmatpush.bf16.msra.mxu0 0
        %1124 = vmatpush.bf16.msra.mxu0 0
        %1125 = vmatpush.bf16.msra.mxu0 0
        %1126 = vmatpush.bf16.msra.mxu0 0
        %1127 = vmatpush.bf16.msra.mxu0 0
        %1128 = vmatpush.bf16.msra.mxu0 0
        %1129 = vmatpush.bf16.msra.mxu0 %v1114
        %1130 = vmatpush.bf16.msra.mxu0 %v1113
        %1131 = vmatmul.bf16.gmra.mxu0 %v1118
        %v1132 = vpop.f32.mrf.mxu0
        %v1133 = vadd.f32 0.0, %v1132
        %v1134 = vpop.f32.mrf.mxu0
        %v1135 = vadd.f32 0.0, %v1134
        %1136 = vmatmul.bf16.gmra.mxu0 %v1121
        %v1137 = vpop.f32.mrf.mxu0
        %v1138 = vadd.f32 0.0, %v1137
        %v1139 = vpop.f32.mrf.mxu0
        %1140 = vdwg.mxu0
        %1141 = vst.msk [vmem:[#allocation4] sm:$0xff] %vm846, %v1133
        %1142 = vst.msk [vmem:[#allocation4 + $0x8] sm:$0xff] %vm846, %v1135
        %1143 = vst.msk [vmem:[#allocation4 + $0x10] sm:$0xff] %vm846, %v1138
        %v1144 = vld [vmem:[%s13] sm:$0xf]
        %v1145 = vld [vmem:[%s13 + $0x4] sm:$0xf]
        %v1146 = vld [vmem:[%s13 + $0x8] sm:$0xf]
        %v1147 = vld [vmem:[%s13 + $0xc] sm:$0xf]
        %v1148 = vld [vmem:[%s14] sm:$0x1]
        %v1150 = vperm.slane %v1148, 0
        %v1156 = vunpack.c.l.b16 %v1144
        %v1157 = vunpack.c.l.b16 %v1145
        %v1158 = vunpack.c.l.b16 %v1146
        %v1159 = vunpack.c.l.b16 %v1147
        %v1160 = vpack.c.b16 %v1157, %v1156
        %v1161 = vpack.c.b16 %v1159, %v1158
        %1164 = vmatpush.bf16.msra.mxu0 0
        %1165 = vmatpush.bf16.msra.mxu0 0
        %1166 = vmatpush.bf16.msra.mxu0 0
        %1167 = vmatpush.bf16.msra.mxu0 0
        %1168 = vmatpush.bf16.msra.mxu0 0
        %1169 = vmatpush.bf16.msra.mxu0 0
        %1170 = vmatpush.bf16.msra.mxu0 %v1161
        %1171 = vmatpush.bf16.msra.mxu0 %v1160
        %1172 = vmatmul.bf16.gmra.mxu0 %v1118
        %v1173 = vpop.f32.mrf.mxu0
        %v1174 = vadd.f32 %v1150, %v1173
        %v1175 = vpop.f32.mrf.mxu0
        %v1176 = vadd.f32 %v1150, %v1175
        %1177 = vmatmul.bf16.gmra.mxu0 %v1121
        %v1178 = vpop.f32.mrf.mxu0
        %v1179 = vadd.f32 %v1150, %v1178
        %v1180 = vpop.f32.mrf.mxu0
        %1181 = vdwg.mxu0
        %vm1182 = vcmp.ge.f32.partialorder %v1174, 0.0
        %vm1183 = vcmp.ge.f32.partialorder %v1176, 0.0
        %vm1184 = vcmp.ge.f32.partialorder %v1179, 0.0
        %v1185 = vmul.f32 %v1174, 0.01
        %v1186 = vmul.f32 %v1176, 0.01
        %v1187 = vmul.f32 %v1179, 0.01
        %v1188 = vsel %vm1182, %v1174, %v1185
        %v1189 = vsel %vm1183, %v1176, %v1186
        %v1190 = vsel %vm1184, %v1179, %v1187
        %1191 = vst.msk [vmem:[#allocation5] sm:$0xff] %vm846, %v1188
        %1192 = vst.msk [vmem:[#allocation5 + $0x8] sm:$0xff] %vm846, %v1189
        %1193 = vst.msk [vmem:[#allocation5 + $0x10] sm:$0xff] %vm846, %v1190
        %v1194 = vld [vmem:[%s12] sm:$0xf]
        %v1195 = vld [vmem:[%s12 + $0x4] sm:$0xf]
        %v1196 = vld [vmem:[%s12 + $0x8] sm:$0xf]
        %v1197 = vld [vmem:[%s12 + $0xc] sm:$0xf]
        %v1202 = vunpack.c.l.b16 %v1194
        %v1203 = vunpack.c.l.b16 %v1195
        %v1204 = vunpack.c.l.b16 %v1196
        %v1205 = vunpack.c.l.b16 %v1197
        %v1206 = vpack.c.b16 %v1203, %v1202
        %v1207 = vpack.c.b16 %v1205, %v1204
        %v1211 = vsel %vm846, %v1099, 0
        %v1214 = vsel %vm846, %v1100, 0
        %1216 = vmatpush.bf16.msra.mxu0 0
        %1217 = vmatpush.bf16.msra.mxu0 0
        %1218 = vmatpush.bf16.msra.mxu0 0
        %1219 = vmatpush.bf16.msra.mxu0 0
        %1220 = vmatpush.bf16.msra.mxu0 0
        %1221 = vmatpush.bf16.msra.mxu0 0
        %1222 = vmatpush.bf16.msra.mxu0 %v1207
        %1223 = vmatpush.bf16.msra.mxu0 %v1206
        %1224 = vmatmul.bf16.gmra.mxu0 %v1211
        %v1225 = vpop.f32.mrf.mxu0
        %v1226 = vadd.f32 0.0, %v1225
        %v1227 = vpop.f32.mrf.mxu0
        %v1228 = vadd.f32 0.0, %v1227
        %1229 = vmatmul.bf16.gmra.mxu0 %v1214
        %v1230 = vpop.f32.mrf.mxu0
        %v1231 = vadd.f32 0.0, %v1230
        %v1232 = vpop.f32.mrf.mxu0
        %1233 = vdwg.mxu0
        %1234 = vst.msk [vmem:[#allocation6] sm:$0xff] %vm846, %v1226
        %1235 = vst.msk [vmem:[#allocation6 + $0x8] sm:$0xff] %vm846, %v1228
        %1236 = vst.msk [vmem:[#allocation6 + $0x10] sm:$0xff] %vm846, %v1231
        %v1237 = vld [vmem:[#allocation6] sm:$0xff]
        %v1238 = vld [vmem:[#allocation4 + $0x8] sm:$0xff]
        %v1239 = vmul.f32 %v1237, %v1238
        %v1240 = vsel %vm846, %v1239, 0.0
        %1241 = vadd.xlane.f32.xlu0 %v1240
        %v1242 = vpop.xlane.xlu0 %1241
        %v1243 = vmul.f32 %v1242, 0.17677669
        %v1244 = vld [vmem:[#allocation4 + $0x10] sm:$0xff]
        %v1245 = vmul.f32 %v1237, %v1244
        %v1246 = vsel %vm846, %v1245, 0.0
        %1247 = vadd.xlane.f32.xlu0 %v1246
        %v1248 = vpop.xlane.xlu0 %1247
        %v1249 = vmul.f32 %v1248, 0.17677669
        %v1250 = vmax.f32 %v1243, %v1249
        %v1251 = vsub.f32 %v1243, %v1250
        %v1252 = vmul.f32 %v1251, 1.442695
        %v1253 = vpow.pop %v1252
        %v1254 = vsub.f32 %v1249, %v1250
        %v1255 = vmul.f32 %v1254, 1.442695
        %v1256 = vpow.pop %v1255
        %v1257 = vadd.f32 %v1253, %v1256
        %v1258 = vrcp.pop %v1257
        %v1259 = vmul.f32 %v1253, %v1258
        %v1260 = vld [vmem:[#allocation5 + $0x8] sm:$0xff]
        %v1261 = vmul.f32 %v1259, %v1260
        %v1262 = vmul.f32 %v1256, %v1258
        %v1263 = vld [vmem:[#allocation5 + $0x10] sm:$0xff]
        %v1264 = vmul.f32 %v1262, %v1263
        %v1265 = vadd.f32 %v1261, %v1264
        %v1266 = vld [vmem:[#allocation3] sm:$0xff]
        %v1267 = vpack.c.bf16 %v1266, %v1266
        %v1268 = vld [vmem:[%s15] sm:$0xf]
        %v1269 = vld [vmem:[%s15 + $0x4] sm:$0xf]
        %v1270 = vld [vmem:[%s15 + $0x8] sm:$0xf]
        %v1271 = vld [vmem:[%s15 + $0xc] sm:$0xf]
        %v1272 = vpack.c.bf16 %v1265, %v1265
        %v1273 = vld [vmem:[%s16] sm:$0xf]
        %v1274 = vld [vmem:[%s16 + $0x4] sm:$0xf]
        %v1275 = vld [vmem:[%s16 + $0x8] sm:$0xf]
        %v1276 = vld [vmem:[%s16 + $0xc] sm:$0xf]
        %v1281 = vunpack.c.l.b16 %v1273
        %v1282 = vunpack.c.l.b16 %v1274
        %v1283 = vunpack.c.l.b16 %v1275
        %v1284 = vunpack.c.l.b16 %v1276
        %v1285 = vpack.c.b16 %v1282, %v1281
        %v1286 = vpack.c.b16 %v1284, %v1283
        %v1290 = vsel %vm846, %v1272, 0
        %1292 = vmatpush.bf16.msra.mxu0 0
        %1293 = vmatpush.bf16.msra.mxu0 0
        %1294 = vmatpush.bf16.msra.mxu0 0
        %1295 = vmatpush.bf16.msra.mxu0 0
        %1296 = vmatpush.bf16.msra.mxu0 0
        %1297 = vmatpush.bf16.msra.mxu0 0
        %1298 = vmatpush.bf16.msra.mxu0 %v1286
        %1299 = vmatpush.bf16.msra.mxu0 %v1285
        %1300 = vmatmul.bf16.gmra.mxu0 %v1290
        %v1301 = vpop.f32.mrf.mxu0
        %v1302 = vadd.f32 0.0, %v1301
        %v1303 = vpop.f32.mrf.mxu0
        %1304 = vdwg.mxu0
        %v1309 = vunpack.c.l.b16 %v1268
        %v1310 = vunpack.c.l.b16 %v1269
        %v1311 = vunpack.c.l.b16 %v1270
        %v1312 = vunpack.c.l.b16 %v1271
        %v1313 = vpack.c.b16 %v1310, %v1309
        %v1314 = vpack.c.b16 %v1312, %v1311
        %v1318 = vsel %vm846, %v1267, 0
        %1320 = vmatpush.bf16.msra.mxu0 0
        %1321 = vmatpush.bf16.msra.mxu0 0
        %1322 = vmatpush.bf16.msra.mxu0 0
        %1323 = vmatpush.bf16.msra.mxu0 0
        %1324 = vmatpush.bf16.msra.mxu0 0
        %1325 = vmatpush.bf16.msra.mxu0 0
        %1326 = vmatpush.bf16.msra.mxu0 %v1314
        %1327 = vmatpush.bf16.msra.mxu0 %v1313
        %1328 = vmatmul.bf16.gmra.mxu0 %v1318
        %v1329 = vpop.f32.mrf.mxu0
        %v1330 = vadd.f32 %v1302, %v1329
        %v1331 = vpop.f32.mrf.mxu0
        %1332 = vdwg.mxu0
        %v1333 = vld [vmem:[%s17] sm:$0x1]
        %v1335 = vperm.slane %v1333, 0
        %v1337 = vadd.f32 %v1330, %v1335
        %vm1338 = vcmp.ge.f32.partialorder %v1337, 0.0
        %v1339 = vmul.f32 %v1337, 0.01
        %v1340 = vsel %vm1338, %v1337, %v1339
        %v1341 = vpack.c.bf16 %v1340, %v1340
        %v1342 = vld [vmem:[%s18] sm:$0xf]
        %v1343 = vld [vmem:[%s18 + $0x4] sm:$0xf]
        %v1344 = vld [vmem:[%s18 + $0x8] sm:$0xf]
        %v1345 = vld [vmem:[%s18 + $0xc] sm:$0xf]
        %v1346 = vld [vmem:[%s19] sm:$0x1]
        %v1348 = vperm.slane %v1346, 0
        %v1354 = vunpack.c.l.b16 %v1342
        %v1355 = vunpack.c.l.b16 %v1343
        %v1356 = vunpack.c.l.b16 %v1344
        %v1357 = vunpack.c.l.b16 %v1345
        %v1358 = vpack.c.b16 %v1355, %v1354
        %v1359 = vpack.c.b16 %v1357, %v1356
        %v1363 = vsel %vm846, %v1341, 0
        %1365 = vmatpush.bf16.msra.mxu0 0
        %1366 = vmatpush.bf16.msra.mxu0 0
        %1367 = vmatpush.bf16.msra.mxu0 0
        %1368 = vmatpush.bf16.msra.mxu0 0
        %1369 = vmatpush.bf16.msra.mxu0 0
        %1370 = vmatpush.bf16.msra.mxu0 0
        %1371 = vmatpush.bf16.msra.mxu0 %v1359
        %1372 = vmatpush.bf16.msra.mxu0 %v1358
        %1373 = vmatmul.bf16.gmra.mxu0 %v1363
        %v1374 = vpop.f32.mrf.mxu0
        %v1375 = vadd.f32 %v1348, %v1374
        %v1376 = vpop.f32.mrf.mxu0
        %1377 = vdwg.mxu0
        %1378 = vst.msk [vmem:[%s729] sm:$0xff] %vm758, %v1375
        %v1379 = vld [vmem:[#allocation6 + $0x8] sm:$0xff]
        %v1380 = vld [vmem:[#allocation4] sm:$0xff]
        %v1381 = vmul.f32 %v1379, %v1380
        %v1382 = vsel %vm846, %v1381, 0.0
        %1383 = vadd.xlane.f32.xlu0 %v1382
        %v1384 = vpop.xlane.xlu0 %1383
        %v1385 = vmul.f32 %v1384, 0.17677669
        %v1386 = vld [vmem:[#allocation4 + $0x10] sm:$0xff]
        %v1387 = vmul.f32 %v1379, %v1386
        %v1388 = vsel %vm846, %v1387, 0.0
        %1389 = vadd.xlane.f32.xlu0 %v1388
        %v1390 = vpop.xlane.xlu0 %1389
        %v1391 = vmul.f32 %v1390, 0.17677669
        %v1392 = vmax.f32 %v1385, %v1391
        %v1393 = vsub.f32 %v1385, %v1392
        %v1394 = vmul.f32 %v1393, 1.442695
        %v1395 = vpow.pop %v1394
        %v1396 = vsub.f32 %v1391, %v1392
        %v1397 = vmul.f32 %v1396, 1.442695
        %v1398 = vpow.pop %v1397
        %v1399 = vadd.f32 %v1395, %v1398
        %v1400 = vrcp.pop %v1399
        %v1401 = vmul.f32 %v1395, %v1400
        %v1402 = vld [vmem:[#allocation5] sm:$0xff]
        %v1403 = vmul.f32 %v1401, %v1402
        %v1404 = vmul.f32 %v1398, %v1400
        %v1405 = vld [vmem:[#allocation5 + $0x10] sm:$0xff]
        %v1406 = vmul.f32 %v1404, %v1405
        %v1407 = vadd.f32 %v1403, %v1406
        %v1408 = vld [vmem:[#allocation3 + $0x8] sm:$0xff]
        %v1409 = vpack.c.bf16 %v1408, %v1408
        %s1410 = scalar_lea.vmem %s15, 16
        %v1411 = vld [vmem:[%s1410] sm:$0xf]
        %v1412 = vld [vmem:[%s1410 + $0x4] sm:$0xf]
        %v1413 = vld [vmem:[%s1410 + $0x8] sm:$0xf]
        %v1414 = vld [vmem:[%s1410 + $0xc] sm:$0xf]
        %v1415 = vpack.c.bf16 %v1407, %v1407
        %s1416 = scalar_lea.vmem %s16, 16
        %v1417 = vld [vmem:[%s1416] sm:$0xf]
        %v1418 = vld [vmem:[%s1416 + $0x4] sm:$0xf]
        %v1419 = vld [vmem:[%s1416 + $0x8] sm:$0xf]
        %v1420 = vld [vmem:[%s1416 + $0xc] sm:$0xf]
        %v1425 = vunpack.c.l.b16 %v1417
        %v1426 = vunpack.c.l.b16 %v1418
        %v1427 = vunpack.c.l.b16 %v1419
        %v1428 = vunpack.c.l.b16 %v1420
        %v1429 = vpack.c.b16 %v1426, %v1425
        %v1430 = vpack.c.b16 %v1428, %v1427
        %v1434 = vsel %vm846, %v1415, 0
        %1436 = vmatpush.bf16.msra.mxu0 0
        %1437 = vmatpush.bf16.msra.mxu0 0
        %1438 = vmatpush.bf16.msra.mxu0 0
        %1439 = vmatpush.bf16.msra.mxu0 0
        %1440 = vmatpush.bf16.msra.mxu0 0
        %1441 = vmatpush.bf16.msra.mxu0 0
        %1442 = vmatpush.bf16.msra.mxu0 %v1430
        %1443 = vmatpush.bf16.msra.mxu0 %v1429
        %1444 = vmatmul.bf16.gmra.mxu0 %v1434
        %v1445 = vpop.f32.mrf.mxu0
        %v1446 = vadd.f32 0.0, %v1445
        %v1447 = vpop.f32.mrf.mxu0
        %1448 = vdwg.mxu0
        %v1453 = vunpack.c.l.b16 %v1411
        %v1454 = vunpack.c.l.b16 %v1412
        %v1455 = vunpack.c.l.b16 %v1413
        %v1456 = vunpack.c.l.b16 %v1414
        %v1457 = vpack.c.b16 %v1454, %v1453
        %v1458 = vpack.c.b16 %v1456, %v1455
        %v1462 = vsel %vm846, %v1409, 0
        %1464 = vmatpush.bf16.msra.mxu0 0
        %1465 = vmatpush.bf16.msra.mxu0 0
        %1466 = vmatpush.bf16.msra.mxu0 0
        %1467 = vmatpush.bf16.msra.mxu0 0
        %1468 = vmatpush.bf16.msra.mxu0 0
        %1469 = vmatpush.bf16.msra.mxu0 0
        %1470 = vmatpush.bf16.msra.mxu0 %v1458
        %1471 = vmatpush.bf16.msra.mxu0 %v1457
        %1472 = vmatmul.bf16.gmra.mxu0 %v1462
        %v1473 = vpop.f32.mrf.mxu0
        %v1474 = vadd.f32 %v1446, %v1473
        %v1475 = vpop.f32.mrf.mxu0
        %1476 = vdwg.mxu0
        %s1477 = scalar_lea.vmem %s17, 1
        %v1478 = vld [vmem:[%s1477] sm:$0x1]
        %v1480 = vperm.slane %v1478, 0
        %v1482 = vadd.f32 %v1474, %v1480
        %vm1483 = vcmp.ge.f32.partialorder %v1482, 0.0
        %v1484 = vmul.f32 %v1482, 0.01
        %v1485 = vsel %vm1483, %v1482, %v1484
        %v1486 = vpack.c.bf16 %v1485, %v1485
        %s1487 = scalar_lea.vmem %s18, 16
        %v1488 = vld [vmem:[%s1487] sm:$0xf]
        %v1489 = vld [vmem:[%s1487 + $0x4] sm:$0xf]
        %v1490 = vld [vmem:[%s1487 + $0x8] sm:$0xf]
        %v1491 = vld [vmem:[%s1487 + $0xc] sm:$0xf]
        %s1492 = scalar_lea.vmem %s19, 1
        %v1493 = vld [vmem:[%s1492] sm:$0x1]
        %v1495 = vperm.slane %v1493, 0
        %v1501 = vunpack.c.l.b16 %v1488
        %v1502 = vunpack.c.l.b16 %v1489
        %v1503 = vunpack.c.l.b16 %v1490
        %v1504 = vunpack.c.l.b16 %v1491
        %v1505 = vpack.c.b16 %v1502, %v1501
        %v1506 = vpack.c.b16 %v1504, %v1503
        %v1510 = vsel %vm846, %v1486, 0
        %1512 = vmatpush.bf16.msra.mxu0 0
        %1513 = vmatpush.bf16.msra.mxu0 0
        %1514 = vmatpush.bf16.msra.mxu0 0
        %1515 = vmatpush.bf16.msra.mxu0 0
        %1516 = vmatpush.bf16.msra.mxu0 0
        %1517 = vmatpush.bf16.msra.mxu0 0
        %1518 = vmatpush.bf16.msra.mxu0 %v1506
        %1519 = vmatpush.bf16.msra.mxu0 %v1505
        %1520 = vmatmul.bf16.gmra.mxu0 %v1510
        %v1521 = vpop.f32.mrf.mxu0
        %v1522 = vadd.f32 %v1495, %v1521
        %v1523 = vpop.f32.mrf.mxu0
        %1524 = vdwg.mxu0
        %s1525 = scalar_lea.vmem %s729, 8 [#allocation9]
        %1526 = vst.msk [vmem:[%s1525] sm:$0xff] %vm758, %v1522
        %v1527 = vld [vmem:[#allocation6 + $0x10] sm:$0xff]
        %v1528 = vld [vmem:[#allocation4] sm:$0xff]
        %v1529 = vmul.f32 %v1527, %v1528
        %v1530 = vsel %vm846, %v1529, 0.0
        %1531 = vadd.xlane.f32.xlu0 %v1530
        %v1532 = vpop.xlane.xlu0 %1531
        %v1533 = vmul.f32 %v1532, 0.17677669
        %v1534 = vld [vmem:[#allocation4 + $0x8] sm:$0xff]
        %v1535 = vmul.f32 %v1527, %v1534
        %v1536 = vsel %vm846, %v1535, 0.0
        %1537 = vadd.xlane.f32.xlu0 %v1536
        %v1538 = vpop.xlane.xlu0 %1537
        %v1539 = vmul.f32 %v1538, 0.17677669
        %v1540 = vmax.f32 %v1533, %v1539
        %v1541 = vsub.f32 %v1533, %v1540
        %v1542 = vmul.f32 %v1541, 1.442695
        %v1543 = vpow.pop %v1542
        %v1544 = vsub.f32 %v1539, %v1540
        %v1545 = vmul.f32 %v1544, 1.442695
        %v1546 = vpow.pop %v1545
        %v1547 = vadd.f32 %v1543, %v1546
        %v1548 = vrcp.pop %v1547
        %v1549 = vmul.f32 %v1543, %v1548
        %v1550 = vld [vmem:[#allocation5] sm:$0xff]
        %v1551 = vmul.f32 %v1549, %v1550
        %v1552 = vmul.f32 %v1546, %v1548
        %v1553 = vld [vmem:[#allocation5 + $0x8] sm:$0xff]
        %v1554 = vmul.f32 %v1552, %v1553
        %v1555 = vadd.f32 %v1551, %v1554
        %v1556 = vld [vmem:[#allocation3 + $0x10] sm:$0xff]
        %v1557 = vpack.c.bf16 %v1556, %v1556
        %s1558 = scalar_lea.vmem %s15, 32
        %v1559 = vld [vmem:[%s1558] sm:$0xf]
        %v1560 = vld [vmem:[%s1558 + $0x4] sm:$0xf]
        %v1561 = vld [vmem:[%s1558 + $0x8] sm:$0xf]
        %v1562 = vld [vmem:[%s1558 + $0xc] sm:$0xf]
        %v1563 = vpack.c.bf16 %v1555, %v1555
        %s1564 = scalar_lea.vmem %s16, 32
        %v1565 = vld [vmem:[%s1564] sm:$0xf]
        %v1566 = vld [vmem:[%s1564 + $0x4] sm:$0xf]
        %v1567 = vld [vmem:[%s1564 + $0x8] sm:$0xf]
        %v1568 = vld [vmem:[%s1564 + $0xc] sm:$0xf]
        %v1573 = vunpack.c.l.b16 %v1565
        %v1574 = vunpack.c.l.b16 %v1566
        %v1575 = vunpack.c.l.b16 %v1567
        %v1576 = vunpack.c.l.b16 %v1568
        %v1577 = vpack.c.b16 %v1574, %v1573
        %v1578 = vpack.c.b16 %v1576, %v1575
        %v1582 = vsel %vm846, %v1563, 0
        %1584 = vmatpush.bf16.msra.mxu0 0
        %1585 = vmatpush.bf16.msra.mxu0 0
        %1586 = vmatpush.bf16.msra.mxu0 0
        %1587 = vmatpush.bf16.msra.mxu0 0
        %1588 = vmatpush.bf16.msra.mxu0 0
        %1589 = vmatpush.bf16.msra.mxu0 0
        %1590 = vmatpush.bf16.msra.mxu0 %v1578
        %1591 = vmatpush.bf16.msra.mxu0 %v1577
        %1592 = vmatmul.bf16.gmra.mxu0 %v1582
        %v1593 = vpop.f32.mrf.mxu0
        %v1594 = vadd.f32 0.0, %v1593
        %v1595 = vpop.f32.mrf.mxu0
        %1596 = vdwg.mxu0
        %v1601 = vunpack.c.l.b16 %v1559
        %v1602 = vunpack.c.l.b16 %v1560
        %v1603 = vunpack.c.l.b16 %v1561
        %v1604 = vunpack.c.l.b16 %v1562
        %v1605 = vpack.c.b16 %v1602, %v1601
        %v1606 = vpack.c.b16 %v1604, %v1603
        %v1610 = vsel %vm846, %v1557, 0
        %1612 = vmatpush.bf16.msra.mxu0 0
        %1613 = vmatpush.bf16.msra.mxu0 0
        %1614 = vmatpush.bf16.msra.mxu0 0
        %1615 = vmatpush.bf16.msra.mxu0 0
        %1616 = vmatpush.bf16.msra.mxu0 0
        %1617 = vmatpush.bf16.msra.mxu0 0
        %1618 = vmatpush.bf16.msra.mxu0 %v1606
        %1619 = vmatpush.bf16.msra.mxu0 %v1605
        %1620 = vmatmul.bf16.gmra.mxu0 %v1610
        %v1621 = vpop.f32.mrf.mxu0
        %v1622 = vadd.f32 %v1594, %v1621
        %v1623 = vpop.f32.mrf.mxu0
        %1624 = vdwg.mxu0
        %s1625 = scalar_lea.vmem %s17, 2
        %v1626 = vld [vmem:[%s1625] sm:$0x1]
        %v1628 = vperm.slane %v1626, 0
        %v1630 = vadd.f32 %v1622, %v1628
        %vm1631 = vcmp.ge.f32.partialorder %v1630, 0.0
        %v1632 = vmul.f32 %v1630, 0.01
        %v1633 = vsel %vm1631, %v1630, %v1632
        %v1634 = vpack.c.bf16 %v1633, %v1633
        %s1635 = scalar_lea.vmem %s18, 32
        %v1636 = vld [vmem:[%s1635] sm:$0xf]
        %v1637 = vld [vmem:[%s1635 + $0x4] sm:$0xf]
        %v1638 = vld [vmem:[%s1635 + $0x8] sm:$0xf]
        %v1639 = vld [vmem:[%s1635 + $0xc] sm:$0xf]
        %s1640 = scalar_lea.vmem %s19, 2
        %v1641 = vld [vmem:[%s1640] sm:$0x1]
        %v1643 = vperm.slane %v1641, 0
        %v1649 = vunpack.c.l.b16 %v1636
        %v1650 = vunpack.c.l.b16 %v1637
        %v1651 = vunpack.c.l.b16 %v1638
        %v1652 = vunpack.c.l.b16 %v1639
        %v1653 = vpack.c.b16 %v1650, %v1649
        %v1654 = vpack.c.b16 %v1652, %v1651
        %v1658 = vsel %vm846, %v1634, 0
        %1660 = vmatpush.bf16.msra.mxu0 0
        %1661 = vmatpush.bf16.msra.mxu0 0
        %1662 = vmatpush.bf16.msra.mxu0 0
        %1663 = vmatpush.bf16.msra.mxu0 0
        %1664 = vmatpush.bf16.msra.mxu0 0
        %1665 = vmatpush.bf16.msra.mxu0 0
        %1666 = vmatpush.bf16.msra.mxu0 %v1654
        %1667 = vmatpush.bf16.msra.mxu0 %v1653
        %1668 = vmatmul.bf16.gmra.mxu0 %v1658
        %v1669 = vpop.f32.mrf.mxu0
        %v1670 = vadd.f32 %v1643, %v1669
        %v1671 = vpop.f32.mrf.mxu0
        %1672 = vdwg.mxu0
        %s1673 = scalar_lea.vmem %s729, 16 [#allocation9]
        %1674 = vst.msk [vmem:[%s1673] sm:$0xff] %vm758, %v1670
        %s1675 = sand.u32 %s469, 1
        %s1676 = sand.u32 %s469, 1
        %s1677 = smul.addr %s1676, 24
        %s1678 = scalar_lea.vmem [#allocation9], %s1677
        // Predicated region
        $region177: #{tpu_custom_call.1} parent=167 // pred_check
          %p1679 = pneg %p479
        $region178: #{tpu_custom_call.1} parent=167 // pred_check_branch
          %1681 = sbr.rel (%p1679) target = $region180
        $region179: #{tpu_custom_call.1} parent=167 // pred_region
          %s1682 = smul.addr %s31, 8
          %s1683 = scalar_lea.vmem %s20, %s1682
          // Predicated region
          $region181: #{tpu_custom_call.1} parent=179 // pred_check
            _
          $region182: #{tpu_custom_call.1} parent=179 // pred_check_branch
            %1685 = sbr.rel (0) target = $region184
          $region183: #{tpu_custom_call.1} parent=179 // pred_region
            // Predicated region
            $region185: #{tpu_custom_call.1} parent=183 // pred_check
              _
            $region186: #{tpu_custom_call.1} parent=183 // pred_check_branch
              %1687 = sbr.rel (0) target = $region188
            $region187: #{tpu_custom_call.1} parent=183 // pred_region
              // Predicated region
              $region200: #{tpu_custom_call.1} parent=187 // pred_check
                _
              $region201: #{tpu_custom_call.1} parent=187 // pred_check_branch
                %1707 = sbr.rel (0) target = $region203
              $region202: #{tpu_custom_call.1} parent=187 // pred_region
                loop: start=0, step=1, limit=1
                $region204: #{tpu_custom_call.1} parent=202 // loop_pre_header
                  _
                $region205: #{tpu_custom_call.1} parent=202 // loop_header
                  %s1709 = sphi 0, %s1713
                  %p1710 = scmp.ge.s32.totalorder %s1709, 1
                  %s1714 = sphi %s1678, %s1678
                  %s1715 = sphi %s1683, %s1683
                $region206: #{tpu_custom_call.1} parent=202 // loop_header_branch
                  %1712 = sbr.rel (%p1710) target = $region210
                $region207: #{tpu_custom_call.1} parent=202 // loop_body
                  %v1716 = vld [vmem:[%s1714] sm:$0xff]
                  %1717 = vst [vmem:[%s1715] sm:$0xff] %v1716
                  %v1718 = vld [vmem:[%s1714 + $0x8] sm:$0xff]
                  %1719 = vst [vmem:[%s1715 + $0x10] sm:$0xff] %v1718
                  %v1720 = vld [vmem:[%s1714 + $0x10] sm:$0xff]
                  %1721 = vst [vmem:[%s1715 + $0x20] sm:$0xff] %v1720
                $region208: #{tpu_custom_call.1} parent=202 // loop_footer
                  %s1713 = sadd.s32 1, %s1709
                $region209: #{tpu_custom_call.1} parent=202 // loop_footer_branch
                  %1708 = sbr.rel target = $region205
                $region210: #{tpu_custom_call.1} parent=202 // loop_exit
                  _
              $region203: #{tpu_custom_call.1} parent=187 // pred_fallthru
                _
              // Predicated region
              $region211: #{tpu_custom_call.1} parent=187 // pred_check
                _
              $region212: #{tpu_custom_call.1} parent=187 // pred_check_branch
                %1723 = sbr.rel target = $region214
              $region213: #{tpu_custom_call.1} parent=187 // pred_region
                _
              $region214: #{tpu_custom_call.1} parent=187 // pred_fallthru
                _
            $region188: #{tpu_custom_call.1} parent=183 // pred_fallthru
              _
            // Predicated region
            $region189: #{tpu_custom_call.1} parent=183 // pred_check
              _
            $region190: #{tpu_custom_call.1} parent=183 // pred_check_branch
              %1689 = sbr.rel target = $region192
            $region191: #{tpu_custom_call.1} parent=183 // pred_region
              %s1691 = ssub.s32 256, 1
              loop: start=0, step=1, limit=1
              $region193: #{tpu_custom_call.1} parent=191 // loop_pre_header
                _
              $region194: #{tpu_custom_call.1} parent=191 // loop_header
                %s1693 = sphi 0, %s1697
                %p1694 = scmp.ge.s32.totalorder %s1693, 1
                %s1698 = sphi %s1678, %s1678
                %s1699 = sphi %s1683, %s1683
              $region195: #{tpu_custom_call.1} parent=191 // loop_header_branch
                %1696 = sbr.rel (%p1694) target = $region199
              $region196: #{tpu_custom_call.1} parent=191 // loop_body
                %v1700 = vld [vmem:[%s1698] sm:%s1691]
                %1701 = vst [vmem:[%s1699] sm:%s1691] %v1700
                %v1702 = vld [vmem:[%s1698 + $0x8] sm:%s1691]
                %1703 = vst [vmem:[%s1699 + $0x10] sm:%s1691] %v1702
                %v1704 = vld [vmem:[%s1698 + $0x10] sm:%s1691]
                %1705 = vst [vmem:[%s1699 + $0x20] sm:%s1691] %v1704
              $region197: #{tpu_custom_call.1} parent=191 // loop_footer
                %s1697 = sadd.s32 1, %s1693
              $region198: #{tpu_custom_call.1} parent=191 // loop_footer_branch
                %1692 = sbr.rel target = $region194
              $region199: #{tpu_custom_call.1} parent=191 // loop_exit
                _
            $region192: #{tpu_custom_call.1} parent=183 // pred_fallthru
              _
          $region184: #{tpu_custom_call.1} parent=179 // pred_fallthru
            _
          %1724 = vnop
        $region180: #{tpu_custom_call.1} parent=167 // pred_fallthru
          _
      $region168: #{tpu_custom_call.1} parent=5 // pred_fallthru
        _
      %p1725 = scmp.le.s32.totalorder 2, %s26
      // Predicated region
      $region215: #{tpu_custom_call.1} parent=5 // pred_check
        %p1726 = pneg %p1725
      $region216: #{tpu_custom_call.1} parent=5 // pred_check_branch
        %1728 = sbr.rel (%p1726) target = $region218
      $region217: #{tpu_custom_call.1} parent=5 // pred_region
        %s1729 = ssub.s32 %s26, 2
        // Predicated region
        $region219: #{tpu_custom_call.1} parent=217 // pred_check
          %p1730 = pneg %p485
        $region220: #{tpu_custom_call.1} parent=217 // pred_check_branch
          %1732 = sbr.rel (%p1730) target = $region222
        $region221: #{tpu_custom_call.1} parent=217 // pred_region
          %s1733 = sand.u32 %s470, 1
          %s1734 = sand.u32 %s470, 1
          %s1735 = smul.addr %s1734, 24
          %s1736 = scalar_lea.vmem [#allocation9], %s1735
        $region222: #{tpu_custom_call.1} parent=217 // pred_fallthru
          _
      $region218: #{tpu_custom_call.1} parent=5 // pred_fallthru
        _
    $region6: #{tpu_custom_call.1} parent=1 // loop_footer
      %s30 = sadd.s32 1, %s26
    $region7: #{tpu_custom_call.1} parent=1 // loop_footer_branch
      %25 = sbr.rel target = $region3
    $region8: #{tpu_custom_call.1} parent=1 // loop_exit
      _

</llo_original>
